<compile_context>
chip_gen: v6e
topology: v6e:2x2x1
jax: 0.10.0
libtpu: 0.0.40
codegen_flags: <defaults>
</compile_context>

<pallas_src>
import math
from functools import partial

import jax
import jax.numpy as jnp
from jax import lax
from jax.experimental import pallas as pl
from jax.experimental.pallas import tpu as pltpu


def _mha_kernel(x_ref, wq_ref, wk_ref, wv_ref, wu_ref, bu_ref, o_ref,
                q_s, k_s, v_s, *, num_heads, emb, seq, tb, use_bf16,
                approx_reciprocal, unroll):
    """One grid step = `tb` batch elements, all heads fused.

    x_ref   : (tb*seq, emb)          input rows for this batch block
    wq/wk/wv_ref : (emb, h*emb)      fused projection weights (in x out), grid-invariant
    wu_ref  : (h*emb, emb)           unifying linear weight (in x out), grid-invariant
    bu_ref  : (1, emb) f32           unifying bias
    o_ref   : (tb*seq, emb)          output rows for this batch block
    q_s/k_s/v_s : (tb*seq, h*emb)    fused projection results (bf16 if use_bf16 else f32)
    """
    h = num_heads
    mm_dtype = jnp.bfloat16 if use_bf16 else jnp.float32
    inv_sqrt_dk = 1.0 / math.sqrt(emb)

    x2 = x_ref[...]
    if use_bf16:
        x2 = x2.astype(jnp.bfloat16)

    # Fused projections: one big matmul per Q/K/V covering all heads and all tb batches.
    # The cast to the matmul dtype is hoisted here (done once) instead of per head.
    q_s[...] = (jnp.dot(x2, wq_ref[...], preferred_element_type=jnp.float32)
                * inv_sqrt_dk).astype(mm_dtype)          # scale folded into Q
    k_s[...] = jnp.dot(x2, wk_ref[...],
                       preferred_element_type=jnp.float32).astype(mm_dtype)
    v_s[...] = jnp.dot(x2, wv_ref[...],
                       preferred_element_type=jnp.float32).astype(mm_dtype)

    bias = bu_ref[...]                                    # (1, emb) f32, hoisted

    def per_batch(bi, carry):
        r0 = pl.multiple_of(bi * seq, seq)
        acc = jnp.zeros((seq, emb), jnp.float32)          # unify accumulator (registers)
        for hi in range(h):                               # h is small & static
            c0 = hi * emb
            q_bh = q_s[pl.ds(r0, seq), c0:c0 + emb]       # (seq, emb)
            k_bh = k_s[pl.ds(r0, seq), c0:c0 + emb]
            v_bh = v_s[pl.ds(r0, seq), c0:c0 + emb]

            s = jnp.dot(q_bh, k_bh.T,
                        preferred_element_type=jnp.float32)   # (seq, seq) f32

            # softmax over keys (f32 math)
            m = jnp.max(s, axis=-1, keepdims=True)
            e = jnp.exp(s - m)
            denom = jnp.sum(e, axis=-1, keepdims=True)
            if approx_reciprocal:
                w = e * pl.reciprocal(denom, approx=True)     # EUP slot, off the VALU
            else:
                w = e / denom                                 # exact parity mode

            y_bh = jnp.dot(w.astype(mm_dtype), v_bh,
                           preferred_element_type=jnp.float32)     # (seq, emb)
            # Per-head unify contribution: no y scratch round-trip.
            acc = acc + jnp.dot(y_bh.astype(mm_dtype), wu_ref[c0:c0 + emb, :],
                                preferred_element_type=jnp.float32)

        o_ref[pl.ds(r0, seq), :] = (acc + bias).astype(o_ref.dtype)
        return carry

    lax.fori_loop(0, tb, per_batch, 0, unroll=unroll)


def _round_up(v, m):
    return -(-v // m) * m


def _padded_bytes(rows, cols, dtype):
    """Conservative VMEM bytes for a (rows, cols) tile after (sublane, 128) padding."""
    itemsize = jnp.dtype(dtype).itemsize
    sublane = 8 * max(1, 4 // itemsize)
    return _round_up(max(rows, 1), sublane) * _round_up(max(cols, 1), 128) * itemsize


def _vmem_limit_bytes(t, k, h, tb, wdtype, out_dtype):
    rows = tb * t
    est = 0
    est += 2 * _padded_bytes(rows, k, jnp.float32)      # x block (double-buffered)
    est += 2 * _padded_bytes(rows, k, out_dtype)        # out block (double-buffered)
    est += 3 * 2 * _padded_bytes(k, h * k, wdtype)      # Wq/Wk/Wv slabs
    est += 2 * _padded_bytes(h * k, k, wdtype)          # Wu slab
    est += 2 * _padded_bytes(1, k, jnp.float32)         # bias
    est += 3 * _padded_bytes(rows, h * k, wdtype)       # Q/K/V scratch
    est += 6 * _padded_bytes(t, t, jnp.float32)         # per-head scores temporaries
    est += 8 * _padded_bytes(t, k, jnp.float32)         # per-head operands / accumulator
    est = int(est * 2) + (4 << 20)                      # 2x headroom + internal scratch
    kind = jax.devices()[0].device_kind.lower()
    cap = (64 << 20) if "v7" in kind else (128 << 20)   # generation-aware VMEM cap
    return max(32 << 20, min(est, cap))


def _pick_batch_block(b):
    # >= 4 grid steps when possible (>= 2 per TensorCore on v7x) so BlockSpec
    # double-buffering hides the x/o HBM traffic and both v7x TCs are used.
    # For production shapes, also prefer tb such that tb*t is a multiple of 256
    # (v6e/v7x MXU width); at small b, pipelining/megacore wins over tile size.
    target_steps = 4 if b >= 4 else max(b, 1)
    tb = max(1, b // target_steps)
    while b % tb:
        tb -= 1
    return tb


def multi_head_attention(x, wq, wk, wv, wu, bu, num_heads, *,
                         batch_block=None, use_bf16=False, approx_reciprocal=True):
    """
    x  : (b, t, k) float32
    wq, wk, wv : (h*k, k)  PyTorch nn.Linear weight layout (out_features, in_features)
    wu : (k, h*k)          PyTorch nn.Linear weight layout
    bu : (k,)              unifyheads bias
    """
    b, t, k = x.shape
    h = num_heads
    assert wq.shape == (h * k, k) and wk.shape == (h * k, k) and wv.shape == (h * k, k)
    assert wu.shape == (k, h * k) and bu.shape == (k,)

    tb = _pick_batch_block(b) if batch_block is None else batch_block
    assert b % tb == 0, "batch must be divisible by batch_block"
    rows_blk = tb * t
    assert rows_blk % 8 == 0 or tb == b, (
        "tb*t must be a multiple of 8 (sublane) unless the whole batch is one block")

    wdtype = jnp.bfloat16 if use_bf16 else jnp.float32
    # (in, out) layouts so the kernel computes x @ W directly; pre-cast when bf16 so
    # the grid-invariant weight slabs DMA/reside at half the bytes.
    wq_all = wq.T.astype(wdtype)          # (k, h*k)
    wk_all = wk.T.astype(wdtype)
    wv_all = wv.T.astype(wdtype)
    wu_all = wu.T.astype(wdtype)          # (h*k, k)
    bu2 = bu.reshape(1, k).astype(jnp.float32)

    x2 = x.reshape(b * t, k)              # merge (batch, seq) -> rows (free relayout)
    grid = (b // tb,)
    unroll = min(tb, 4)
    vmem_limit = _vmem_limit_bytes(t, k, h, tb, wdtype, x.dtype)

    out2 = pl.pallas_call(
        partial(_mha_kernel, num_heads=h, emb=k, seq=t, tb=tb, use_bf16=use_bf16,
                approx_reciprocal=approx_reciprocal, unroll=unroll),
        out_shape=jax.ShapeDtypeStruct((b * t, k), x.dtype),
        grid_spec=pltpu.PrefetchScalarGridSpec(
            num_scalar_prefetch=0,
            grid=grid,
            in_specs=[
                pl.BlockSpec((rows_blk, k), lambda i: (i, 0)),     # x rows (batch-tiled)
                pl.BlockSpec((k, h * k), lambda i: (0, 0)),        # Wq (VMEM-resident)
                pl.BlockSpec((k, h * k), lambda i: (0, 0)),        # Wk (VMEM-resident)
                pl.BlockSpec((k, h * k), lambda i: (0, 0)),        # Wv (VMEM-resident)
                pl.BlockSpec((h * k, k), lambda i: (0, 0)),        # Wu (VMEM-resident)
                pl.BlockSpec((1, k), lambda i: (0, 0)),            # bias
            ],
            out_specs=pl.BlockSpec((rows_blk, k), lambda i: (i, 0)),
            scratch_shapes=[pltpu.VMEM((rows_blk, h * k), wdtype)] * 3,  # Q/K/V
        ),
        compiler_params=pltpu.CompilerParams(
            dimension_semantics=("parallel",),   # batch axis: megacore + pipelining
            vmem_limit_bytes=vmem_limit,
        ),
    )(x2, wq_all, wk_all, wv_all, wu_all, bu2)
    return out2.reshape(b, t, k)


def _reference(x, wq, wk, wv, wu, bu, num_heads):
    """Pure-JAX mirror of the PyTorch forward, for validation."""
    b, t, k = x.shape
    h = num_heads
    q = (x @ wq.T).reshape(b, t, h, k)
    ke = (x @ wk.T).reshape(b, t, h, k)
    v = (x @ wv.T).reshape(b, t, h, k)
    q = jnp.transpose(q, (0, 2, 1, 3)).reshape(b * h, t, k)
    ke = jnp.transpose(ke, (0, 2, 1, 3)).reshape(b * h, t, k)
    v = jnp.transpose(v, (0, 2, 1, 3)).reshape(b * h, t, k)
    s = jnp.einsum("bqd,bkd->bqk", q, ke) / math.sqrt(k)
    w = jax.nn.softmax(s, axis=-1)
    y = jnp.einsum("bqk,bkd->bqd", w, v).reshape(b, h, t, k)
    y = jnp.transpose(y, (0, 2, 1, 3)).reshape(b, t, h * k)
    return y @ wu.T + bu


if __name__ == "__main__":
    b, t, k = 2, 8, 16
    num_heads = 3

    key = jax.random.PRNGKey(0)
    kx, kq, kk_, kv, ku, kb = jax.random.split(key, 6)

    x = jax.random.normal(kx, (b, t, k), dtype=jnp.float32)
    # nn.Linear weight shapes: (out_features, in_features)
    scale = 1.0 / math.sqrt(k)
    wq = jax.random.uniform(kq, (num_heads * k, k), jnp.float32, -scale, scale)
    wk = jax.random.uniform(kk_, (num_heads * k, k), jnp.float32, -scale, scale)
    wv = jax.random.uniform(kv, (num_heads * k, k), jnp.float32, -scale, scale)
    scale_u = 1.0 / math.sqrt(num_heads * k)
    wu = jax.random.uniform(ku, (k, num_heads * k), jnp.float32, -scale_u, scale_u)
    bu = jax.random.uniform(kb, (k,), jnp.float32, -scale_u, scale_u)

    ref = _reference(x, wq, wk, wv, wu, bu, num_heads)

    # f32 MXU operands, approx EUP reciprocal in the softmax (default fast path).
    out = multi_head_attention(x, wq, wk, wv, wu, bu, num_heads)
    out = jax.block_until_ready(out)
    assert out.shape == (b, t, k)
    err = jnp.max(jnp.abs(out - ref))
    assert jnp.allclose(out, ref, atol=5e-3, rtol=5e-3), f"f32 max abs err = {err}"

    # Exact-division softmax (strict-parity mode).
    out_exact = multi_head_attention(x, wq, wk, wv, wu, bu, num_heads,
                                     approx_reciprocal=False)
    out_exact = jax.block_until_ready(out_exact)
    err_exact = jnp.max(jnp.abs(out_exact - ref))
    assert jnp.allclose(out_exact, ref, atol=5e-3, rtol=5e-3), (
        f"exact max abs err = {err_exact}")

    # bf16 MXU operands (valid on v5e/v6e/v7x), f32 accumulation + f32 softmax math.
    out_bf16 = multi_head_attention(x, wq, wk, wv, wu, bu, num_heads, use_bf16=True)
    out_bf16 = jax.block_until_ready(out_bf16)
    err_bf16 = jnp.max(jnp.abs(out_bf16 - ref))
    assert jnp.allclose(out_bf16, ref, atol=5e-2, rtol=5e-2), (
        f"bf16 max abs err = {err_bf16}")

    print("KERNEL_OK")
</pallas_src>

<mosaic_0001>
module attributes {stable_mosaic.version = 11 : i64} {
  func.func @_mha_kernel(%arg0: i32, %arg1: memref<8x16xf32, #tpu.memory_space<vmem>>, %arg2: memref<16x48xf32, #tpu.memory_space<vmem>>, %arg3: memref<16x48xf32, #tpu.memory_space<vmem>>, %arg4: memref<16x48xf32, #tpu.memory_space<vmem>>, %arg5: memref<48x16xf32, #tpu.memory_space<vmem>>, %arg6: memref<1x16xf32, #tpu.memory_space<vmem>>, %arg7: memref<8x16xf32, #tpu.memory_space<vmem>>, %arg8: memref<8x48xf32, #tpu.memory_space<vmem>>, %arg9: memref<8x48xf32, #tpu.memory_space<vmem>>, %arg10: memref<8x48xf32, #tpu.memory_space<vmem>>) attributes {dimension_semantics = [#tpu.dimension_semantics<parallel>], iteration_bounds = array<i64: 2>, scalar_prefetch = 0 : i64, scratch_operands = 3 : i64, tpu.core_type = #tpu.core_type<tc>, window_params = [{transform_indices = @transform_0, window_bounds = array<i64: 8, 16>}, {pipeline_mode = #tpu.pipeline_mode<synchronous>, transform_indices = @transform_1, window_bounds = array<i64: 16, 48>}, {pipeline_mode = #tpu.pipeline_mode<synchronous>, transform_indices = @transform_2, window_bounds = array<i64: 16, 48>}, {pipeline_mode = #tpu.pipeline_mode<synchronous>, transform_indices = @transform_3, window_bounds = array<i64: 16, 48>}, {pipeline_mode = #tpu.pipeline_mode<synchronous>, transform_indices = @transform_4, window_bounds = array<i64: 48, 16>}, {pipeline_mode = #tpu.pipeline_mode<synchronous>, transform_indices = @transform_5, window_bounds = array<i64: 1, 16>}, {transform_indices = @transform_6, window_bounds = array<i64: 8, 16>}]} {
    %c0 = arith.constant 0 : index
    %c0_0 = arith.constant 0 : index
    %0 = vector.load %arg1[%c0, %c0_0] : memref<8x16xf32, #tpu.memory_space<vmem>>, vector<8x16xf32>
    %c0_1 = arith.constant 0 : index
    %c0_2 = arith.constant 0 : index
    %1 = vector.load %arg2[%c0_1, %c0_2] : memref<16x48xf32, #tpu.memory_space<vmem>>, vector<16x48xf32>
    %cst = arith.constant dense<0.000000e+00> : vector<8x48xf32>
    %2 = tpu.matmul %0, %1, %cst {dimension_numbers = #tpu.dot_dimension_numbers<[1], [0], [0], [1], [0, 0, 1, 1], [], []>} : vector<8x16xf32>, vector<16x48xf32>, vector<8x48xf32> -> vector<8x48xf32>
    %cst_3 = arith.constant 2.500000e-01 : f32
    %3 = vector.broadcast %cst_3 : f32 to vector<8x48xf32>
    %4 = arith.mulf %2, %3 : vector<8x48xf32>
    %c0_4 = arith.constant 0 : index
    %c0_5 = arith.constant 0 : index
    %5 = vector.load %arg8[%c0_4, %c0_5] : memref<8x48xf32, #tpu.memory_space<vmem>>, vector<8x48xf32>
    tpu.vector_store %arg8[%c0_4, %c0_5], %4 {strides = array<i32>} : memref<8x48xf32, #tpu.memory_space<vmem>>, vector<8x48xf32>,
    %c0_6 = arith.constant 0 : index
    %c0_7 = arith.constant 0 : index
    %6 = vector.load %arg3[%c0_6, %c0_7] : memref<16x48xf32, #tpu.memory_space<vmem>>, vector<16x48xf32>
    %cst_8 = arith.constant dense<0.000000e+00> : vector<8x48xf32>
    %7 = tpu.matmul %0, %6, %cst_8 {dimension_numbers = #tpu.dot_dimension_numbers<[1], [0], [0], [1], [0, 0, 1, 1], [], []>} : vector<8x16xf32>, vector<16x48xf32>, vector<8x48xf32> -> vector<8x48xf32>
    %c0_9 = arith.constant 0 : index
    %c0_10 = arith.constant 0 : index
    %8 = vector.load %arg9[%c0_9, %c0_10] : memref<8x48xf32, #tpu.memory_space<vmem>>, vector<8x48xf32>
    tpu.vector_store %arg9[%c0_9, %c0_10], %7 {strides = array<i32>} : memref<8x48xf32, #tpu.memory_space<vmem>>, vector<8x48xf32>,
    %c0_11 = arith.constant 0 : index
    %c0_12 = arith.constant 0 : index
    %9 = vector.load %arg4[%c0_11, %c0_12] : memref<16x48xf32, #tpu.memory_space<vmem>>, vector<16x48xf32>
    %cst_13 = arith.constant dense<0.000000e+00> : vector<8x48xf32>
    %10 = tpu.matmul %0, %9, %cst_13 {dimension_numbers = #tpu.dot_dimension_numbers<[1], [0], [0], [1], [0, 0, 1, 1], [], []>} : vector<8x16xf32>, vector<16x48xf32>, vector<8x48xf32> -> vector<8x48xf32>
    %c0_14 = arith.constant 0 : index
    %c0_15 = arith.constant 0 : index
    %11 = vector.load %arg10[%c0_14, %c0_15] : memref<8x48xf32, #tpu.memory_space<vmem>>, vector<8x48xf32>
    tpu.vector_store %arg10[%c0_14, %c0_15], %10 {strides = array<i32>} : memref<8x48xf32, #tpu.memory_space<vmem>>, vector<8x48xf32>,
    %c0_16 = arith.constant 0 : index
    %c0_17 = arith.constant 0 : index
    %12 = vector.load %arg6[%c0_16, %c0_17] : memref<1x16xf32, #tpu.memory_space<vmem>>, vector<1x16xf32>
    %c0_i32 = arith.constant 0 : i32
    %c8_i32 = arith.constant 8 : i32
    %13 = arith.muli %c0_i32, %c8_i32 : i32
    %14 = tpu.assume_multiple %13, 8 : i32
    %cst_18 = arith.constant 0.000000e+00 : f32
    %15 = vector.broadcast %cst_18 : f32 to vector<8x16xf32>
    %16 = arith.index_cast %14 : i32 to index
    %c0_19 = arith.constant 0 : index
    %17 = vector.load %arg8[%16, %c0_19] : memref<8x48xf32, #tpu.memory_space<vmem>>, vector<8x16xf32>
    %18 = arith.index_cast %14 : i32 to index
    %c0_20 = arith.constant 0 : index
    %19 = vector.load %arg9[%18, %c0_20] : memref<8x48xf32, #tpu.memory_space<vmem>>, vector<8x16xf32>
    %20 = arith.index_cast %14 : i32 to index
    %c0_21 = arith.constant 0 : index
    %21 = vector.load %arg10[%20, %c0_21] : memref<8x48xf32, #tpu.memory_space<vmem>>, vector<8x16xf32>
    %22 = tpu.transpose %19, [1, 0] : vector<8x16xf32> -> vector<16x8xf32>
    %cst_22 = arith.constant dense<0.000000e+00> : vector<8x8xf32>
    %23 = tpu.matmul %17, %22, %cst_22 {dimension_numbers = #tpu.dot_dimension_numbers<[1], [0], [0], [1], [0, 0, 1, 1], [], []>} : vector<8x16xf32>, vector<16x8xf32>, vector<8x8xf32> -> vector<8x8xf32>
    %cst_23 = arith.constant dense<0xFF800000> : vector<8xf32>
    %24 = vector.multi_reduction <maximumf>, %23, %cst_23 [1] : vector<8x8xf32> to vector<8xf32>
    %25 = vector.shape_cast %24 : vector<8xf32> to vector<8x1xf32>
    %26 = vector.broadcast %25 : vector<8x1xf32> to vector<8x8xf32>
    %27 = arith.subf %23, %26 : vector<8x8xf32>
    %28 = math.exp %27 : vector<8x8xf32>
    %cst_24 = arith.constant dense<0.000000e+00> : vector<8xf32>
    %29 = vector.multi_reduction <add>, %28, %cst_24 [1] : vector<8x8xf32> to vector<8xf32>
    %30 = vector.shape_cast %29 : vector<8xf32> to vector<8x1xf32>
    %31 = tpu.reciprocal %30 {approx = true} : vector<8x1xf32> -> vector<8x1xf32>
    %32 = vector.broadcast %31 : vector<8x1xf32> to vector<8x8xf32>
    %33 = arith.mulf %28, %32 : vector<8x8xf32>
    %cst_25 = arith.constant dense<0.000000e+00> : vector<8x16xf32>
    %34 = tpu.matmul %33, %21, %cst_25 {dimension_numbers = #tpu.dot_dimension_numbers<[1], [0], [0], [1], [0, 0, 1, 1], [], []>} : vector<8x8xf32>, vector<8x16xf32>, vector<8x16xf32> -> vector<8x16xf32>
    %c0_26 = arith.constant 0 : index
    %c0_27 = arith.constant 0 : index
    %35 = vector.load %arg5[%c0_26, %c0_27] : memref<48x16xf32, #tpu.memory_space<vmem>>, vector<16x16xf32>
    %cst_28 = arith.constant dense<0.000000e+00> : vector<8x16xf32>
    %36 = tpu.matmul %34, %35, %cst_28 {dimension_numbers = #tpu.dot_dimension_numbers<[1], [0], [0], [1], [0, 0, 1, 1], [], []>} : vector<8x16xf32>, vector<16x16xf32>, vector<8x16xf32> -> vector<8x16xf32>
    %37 = arith.addf %15, %36 : vector<8x16xf32>
    %38 = arith.index_cast %14 : i32 to index
    %c16 = arith.constant 16 : index
    %39 = vector.load %arg8[%38, %c16] : memref<8x48xf32, #tpu.memory_space<vmem>>, vector<8x16xf32>
    %40 = arith.index_cast %14 : i32 to index
    %c16_29 = arith.constant 16 : index
    %41 = vector.load %arg9[%40, %c16_29] : memref<8x48xf32, #tpu.memory_space<vmem>>, vector<8x16xf32>
    %42 = arith.index_cast %14 : i32 to index
    %c16_30 = arith.constant 16 : index
    %43 = vector.load %arg10[%42, %c16_30] : memref<8x48xf32, #tpu.memory_space<vmem>>, vector<8x16xf32>
    %44 = tpu.transpose %41, [1, 0] : vector<8x16xf32> -> vector<16x8xf32>
    %cst_31 = arith.constant dense<0.000000e+00> : vector<8x8xf32>
    %45 = tpu.matmul %39, %44, %cst_31 {dimension_numbers = #tpu.dot_dimension_numbers<[1], [0], [0], [1], [0, 0, 1, 1], [], []>} : vector<8x16xf32>, vector<16x8xf32>, vector<8x8xf32> -> vector<8x8xf32>
    %cst_32 = arith.constant dense<0xFF800000> : vector<8xf32>
    %46 = vector.multi_reduction <maximumf>, %45, %cst_32 [1] : vector<8x8xf32> to vector<8xf32>
    %47 = vector.shape_cast %46 : vector<8xf32> to vector<8x1xf32>
    %48 = vector.broadcast %47 : vector<8x1xf32> to vector<8x8xf32>
    %49 = arith.subf %45, %48 : vector<8x8xf32>
    %50 = math.exp %49 : vector<8x8xf32>
    %cst_33 = arith.constant dense<0.000000e+00> : vector<8xf32>
    %51 = vector.multi_reduction <add>, %50, %cst_33 [1] : vector<8x8xf32> to vector<8xf32>
    %52 = vector.shape_cast %51 : vector<8xf32> to vector<8x1xf32>
    %53 = tpu.reciprocal %52 {approx = true} : vector<8x1xf32> -> vector<8x1xf32>
    %54 = vector.broadcast %53 : vector<8x1xf32> to vector<8x8xf32>
    %55 = arith.mulf %50, %54 : vector<8x8xf32>
    %cst_34 = arith.constant dense<0.000000e+00> : vector<8x16xf32>
    %56 = tpu.matmul %55, %43, %cst_34 {dimension_numbers = #tpu.dot_dimension_numbers<[1], [0], [0], [1], [0, 0, 1, 1], [], []>} : vector<8x8xf32>, vector<8x16xf32>, vector<8x16xf32> -> vector<8x16xf32>
    %c16_35 = arith.constant 16 : index
    %c0_36 = arith.constant 0 : index
    %57 = vector.load %arg5[%c16_35, %c0_36] : memref<48x16xf32, #tpu.memory_space<vmem>>, vector<16x16xf32>
    %cst_37 = arith.constant dense<0.000000e+00> : vector<8x16xf32>
    %58 = tpu.matmul %56, %57, %cst_37 {dimension_numbers = #tpu.dot_dimension_numbers<[1], [0], [0], [1], [0, 0, 1, 1], [], []>} : vector<8x16xf32>, vector<16x16xf32>, vector<8x16xf32> -> vector<8x16xf32>
    %59 = arith.addf %37, %58 : vector<8x16xf32>
    %60 = arith.index_cast %14 : i32 to index
    %c32 = arith.constant 32 : index
    %61 = vector.load %arg8[%60, %c32] : memref<8x48xf32, #tpu.memory_space<vmem>>, vector<8x16xf32>
    %62 = arith.index_cast %14 : i32 to index
    %c32_38 = arith.constant 32 : index
    %63 = vector.load %arg9[%62, %c32_38] : memref<8x48xf32, #tpu.memory_space<vmem>>, vector<8x16xf32>
    %64 = arith.index_cast %14 : i32 to index
    %c32_39 = arith.constant 32 : index
    %65 = vector.load %arg10[%64, %c32_39] : memref<8x48xf32, #tpu.memory_space<vmem>>, vector<8x16xf32>
    %66 = tpu.transpose %63, [1, 0] : vector<8x16xf32> -> vector<16x8xf32>
    %cst_40 = arith.constant dense<0.000000e+00> : vector<8x8xf32>
    %67 = tpu.matmul %61, %66, %cst_40 {dimension_numbers = #tpu.dot_dimension_numbers<[1], [0], [0], [1], [0, 0, 1, 1], [], []>} : vector<8x16xf32>, vector<16x8xf32>, vector<8x8xf32> -> vector<8x8xf32>
    %cst_41 = arith.constant dense<0xFF800000> : vector<8xf32>
    %68 = vector.multi_reduction <maximumf>, %67, %cst_41 [1] : vector<8x8xf32> to vector<8xf32>
    %69 = vector.shape_cast %68 : vector<8xf32> to vector<8x1xf32>
    %70 = vector.broadcast %69 : vector<8x1xf32> to vector<8x8xf32>
    %71 = arith.subf %67, %70 : vector<8x8xf32>
    %72 = math.exp %71 : vector<8x8xf32>
    %cst_42 = arith.constant dense<0.000000e+00> : vector<8xf32>
    %73 = vector.multi_reduction <add>, %72, %cst_42 [1] : vector<8x8xf32> to vector<8xf32>
    %74 = vector.shape_cast %73 : vector<8xf32> to vector<8x1xf32>
    %75 = tpu.reciprocal %74 {approx = true} : vector<8x1xf32> -> vector<8x1xf32>
    %76 = vector.broadcast %75 : vector<8x1xf32> to vector<8x8xf32>
    %77 = arith.mulf %72, %76 : vector<8x8xf32>
    %cst_43 = arith.constant dense<0.000000e+00> : vector<8x16xf32>
    %78 = tpu.matmul %77, %65, %cst_43 {dimension_numbers = #tpu.dot_dimension_numbers<[1], [0], [0], [1], [0, 0, 1, 1], [], []>} : vector<8x8xf32>, vector<8x16xf32>, vector<8x16xf32> -> vector<8x16xf32>
    %c32_44 = arith.constant 32 : index
    %c0_45 = arith.constant 0 : index
    %79 = vector.load %arg5[%c32_44, %c0_45] : memref<48x16xf32, #tpu.memory_space<vmem>>, vector<16x16xf32>
    %cst_46 = arith.constant dense<0.000000e+00> : vector<8x16xf32>
    %80 = tpu.matmul %78, %79, %cst_46 {dimension_numbers = #tpu.dot_dimension_numbers<[1], [0], [0], [1], [0, 0, 1, 1], [], []>} : vector<8x16xf32>, vector<16x16xf32>, vector<8x16xf32> -> vector<8x16xf32>
    %81 = arith.addf %59, %80 : vector<8x16xf32>
    %82 = vector.broadcast %12 : vector<1x16xf32> to vector<8x16xf32>
    %83 = arith.addf %81, %82 : vector<8x16xf32>
    %84 = arith.index_cast %14 : i32 to index
    %c0_47 = arith.constant 0 : index
    %85 = vector.load %arg7[%84, %c0_47] : memref<8x16xf32, #tpu.memory_space<vmem>>, vector<8x16xf32>
    tpu.vector_store %arg7[%84, %c0_47], %83 {strides = array<i32>} : memref<8x16xf32, #tpu.memory_space<vmem>>, vector<8x16xf32>,
    %c1_i32 = arith.constant 1 : i32
    return
  }
  func.func @transform_0(%arg0: i32) -> (i32, i32) {
    %c0_i32 = arith.constant 0 : i32
    %c0_i32_0 = arith.constant 0 : i32
    return %arg0, %c0_i32 : i32, i32
  }
  func.func @transform_1(%arg0: i32) -> (i32, i32) {
    %c0_i32 = arith.constant 0 : i32
    %c0_i32_0 = arith.constant 0 : i32
    %c0_i32_1 = arith.constant 0 : i32
    return %c0_i32, %c0_i32_0 : i32, i32
  }
  func.func @transform_2(%arg0: i32) -> (i32, i32) {
    %c0_i32 = arith.constant 0 : i32
    %c0_i32_0 = arith.constant 0 : i32
    %c0_i32_1 = arith.constant 0 : i32
    return %c0_i32, %c0_i32_0 : i32, i32
  }
  func.func @transform_3(%arg0: i32) -> (i32, i32) {
    %c0_i32 = arith.constant 0 : i32
    %c0_i32_0 = arith.constant 0 : i32
    %c0_i32_1 = arith.constant 0 : i32
    return %c0_i32, %c0_i32_0 : i32, i32
  }
  func.func @transform_4(%arg0: i32) -> (i32, i32) {
    %c0_i32 = arith.constant 0 : i32
    %c0_i32_0 = arith.constant 0 : i32
    %c0_i32_1 = arith.constant 0 : i32
    return %c0_i32, %c0_i32_0 : i32, i32
  }
  func.func @transform_5(%arg0: i32) -> (i32, i32) {
    %c0_i32 = arith.constant 0 : i32
    %c0_i32_0 = arith.constant 0 : i32
    %c0_i32_1 = arith.constant 0 : i32
    return %c0_i32, %c0_i32_0 : i32, i32
  }
  func.func @transform_6(%arg0: i32) -> (i32, i32) {
    %c0_i32 = arith.constant 0 : i32
    %c0_i32_0 = arith.constant 0 : i32
    return %arg0, %c0_i32 : i32, i32
  }
}

</mosaic_0001>

<llo_original>
// kernel: tpu_custom_call.1
$region0: #{tpu_custom_call.1}
  #allocation0 [shape = 'u32[]', space=smem, size = 0x4, offset = 0x4, fixed_abs, tag = 'smem constant byte address 0x4 - core index']
  #allocation1 [shape = 'u32[144,128]{1,0:T(1,128)}', space=vmem, size = 0x12000, scoped, tag = 'internal scratch']
  #allocation2 [shape = 'f32[8,48]{1,0:T(8,128)}', space=vmem, size = 0x1000, scoped, tag = 'scratch operand']
  #allocation3 [shape = 'f32[8,48]{1,0:T(8,128)}', space=vmem, size = 0x1000, scoped, tag = 'scratch operand']
  #allocation4 [shape = 'f32[8,48]{1,0:T(8,128)}', space=vmem, size = 0x1000, scoped, tag = 'scratch operand']
  %s0 = inlined_call_operand.vmem [shape: f32[16,16], index: 0, kind: input, shape index: {}]
  %s1 = inlined_call_operand.vmem [shape: f32[16,48], index: 1, kind: input, shape index: {}]
  %s2 = inlined_call_operand.vmem [shape: f32[16,48], index: 2, kind: input, shape index: {}]
  %s3 = inlined_call_operand.vmem [shape: f32[16,48], index: 3, kind: input, shape index: {}]
  %s4 = inlined_call_operand.vmem [shape: f32[48,16], index: 4, kind: input, shape index: {}]
  %s5 = inlined_call_operand.vmem [shape: f32[1,16], index: 5, kind: input, shape index: {}]
  %s6 = inlined_call_operand.hbm [shape: f32[16,16], index: 6, kind: output, shape index: {}]
  %s7 = sld [smem:[#allocation0]]
  $region57: #{tpu_custom_call.1} parent=0
    _
  %s9 = ssub.s32 1, %s7
  %s10 = scalar_select 0, %s9, %s7
  $region1: #{tpu_custom_call.1} parent=0
    #allocation5 [shape = 'u8[8192]{0}', space=vmem, size = 0x2000, scoped, tag = 'output window, operand 0']
    #allocation6 [shape = 's32[2]{0}', space=sflag, size = 0x8, scoped, tag = 'scoped memory for tpu_custom_call.1']
    %11 = vsyncpa [#allocation6], 0
    %s12 = scalar_lea.sflag [#allocation6], 1
    %13 = vsyncpa %s12, 0
    loop: start=0, step=1, limit=4
    $region2: #{tpu_custom_call.1} parent=1 // loop_pre_header
      _
    $region3: #{tpu_custom_call.1} parent=1 // loop_header
      %s15 = sphi 0, %s19
      %p16 = scmp.ge.s32.totalorder %s15, 4
      %s25 = sphi 0, %s27
      %s28 = sphi 0, %s25
      %s29 = sphi 0, %s28
      %s45 = sphi 0, %s29
      %s49 = sphi 0, %s49
      %s51 = sphi 0, %s49
      %s52 = sphi 0, %s51
      %s66 = sphi 0, %s52
      %s70 = sphi 0, %s70
      %s72 = sphi 0, %s70
      %s73 = sphi 0, %s72
      %s87 = sphi 0, %s73
      %s91 = sphi 0, %s91
      %s93 = sphi 0, %s91
      %s94 = sphi 0, %s93
      %s108 = sphi 0, %s94
      %s112 = sphi 0, %s112
      %s114 = sphi 0, %s112
      %s115 = sphi 0, %s114
      %s129 = sphi 0, %s115
      %s133 = sphi 0, %s133
      %s135 = sphi 0, %s133
      %s136 = sphi 0, %s135
      %s150 = sphi 0, %s136
      %s156 = sphi 0, %s158
      %s159 = sphi 0, %s156
      %s160 = sphi 0, %s159
      %s176 = sphi 0, %s160
    $region4: #{tpu_custom_call.1} parent=1 // loop_header_branch
      %18 = sbr.rel (%p16) target = $region8
    $region5: #{tpu_custom_call.1} parent=1 // loop_body
      %s20 = ssub.s32 %s15, 1
      %s21 = ssub.s32 %s15, 2
      %s22 = sadd.s32 %s15, 1
      %s23 = ssub.s32 %s15, %s22
      %p24 = scmp.eq.s32.totalorder %s23, 0
      %s26 = sadd.s32 %s25, 1
      %s27 = scalar_select %p24, %s25, %s26
      %p30 = pneg %p24
      %p31 = scmp.eq.s32.totalorder %s15, 1
      %p32 = por %p30, %p31
      %p33 = scmp.ne.s32.totalorder %s25, %s28
      %p34 = scmp.eq.s32.totalorder %s15, 0
      %p35 = por %p33, %p34
      %p36 = scmp.ne.s32.totalorder %s25, %s28
      %p37 = scmp.eq.s32.totalorder %s20, 1
      %p38 = por %p36, %p37
      %p39 = scmp.ne.s32.totalorder %s28, %s29
      %p40 = scmp.eq.s32.totalorder %s20, 0
      %p41 = por %p39, %p40
      %p42 = scmp.ne.s32.totalorder %s28, %s29
      %p43 = scmp.eq.s32.totalorder %s21, 1
      %p44 = por %p42, %p43
      %p46 = scmp.ne.s32.totalorder %s29, %s45
      %p47 = scmp.eq.s32.totalorder %s21, 0
      %p48 = por %p46, %p47
      %s50 = sadd.s32 %s49, 1
      %p53 = scmp.eq.s32.totalorder %s15, 1
      %p54 = scmp.ne.s32.totalorder %s49, %s51
      %p55 = scmp.eq.s32.totalorder %s15, 0
      %p56 = por %p54, %p55
      %p57 = scmp.ne.s32.totalorder %s49, %s51
      %p58 = scmp.eq.s32.totalorder %s20, 1
      %p59 = por %p57, %p58
      %p60 = scmp.ne.s32.totalorder %s51, %s52
      %p61 = scmp.eq.s32.totalorder %s20, 0
      %p62 = por %p60, %p61
      %p63 = scmp.ne.s32.totalorder %s51, %s52
      %p64 = scmp.eq.s32.totalorder %s21, 1
      %p65 = por %p63, %p64
      %p67 = scmp.ne.s32.totalorder %s52, %s66
      %p68 = scmp.eq.s32.totalorder %s21, 0
      %p69 = por %p67, %p68
      %s71 = sadd.s32 %s70, 1
      %p74 = scmp.eq.s32.totalorder %s15, 1
      %p75 = scmp.ne.s32.totalorder %s70, %s72
      %p76 = scmp.eq.s32.totalorder %s15, 0
      %p77 = por %p75, %p76
      %p78 = scmp.ne.s32.totalorder %s70, %s72
      %p79 = scmp.eq.s32.totalorder %s20, 1
      %p80 = por %p78, %p79
      %p81 = scmp.ne.s32.totalorder %s72, %s73
      %p82 = scmp.eq.s32.totalorder %s20, 0
      %p83 = por %p81, %p82
      %p84 = scmp.ne.s32.totalorder %s72, %s73
      %p85 = scmp.eq.s32.totalorder %s21, 1
      %p86 = por %p84, %p85
      %p88 = scmp.ne.s32.totalorder %s73, %s87
      %p89 = scmp.eq.s32.totalorder %s21, 0
      %p90 = por %p88, %p89
      %s92 = sadd.s32 %s91, 1
      %p95 = scmp.eq.s32.totalorder %s15, 1
      %p96 = scmp.ne.s32.totalorder %s91, %s93
      %p97 = scmp.eq.s32.totalorder %s15, 0
      %p98 = por %p96, %p97
      %p99 = scmp.ne.s32.totalorder %s91, %s93
      %p100 = scmp.eq.s32.totalorder %s20, 1
      %p101 = por %p99, %p100
      %p102 = scmp.ne.s32.totalorder %s93, %s94
      %p103 = scmp.eq.s32.totalorder %s20, 0
      %p104 = por %p102, %p103
      %p105 = scmp.ne.s32.totalorder %s93, %s94
      %p106 = scmp.eq.s32.totalorder %s21, 1
      %p107 = por %p105, %p106
      %p109 = scmp.ne.s32.totalorder %s94, %s108
      %p110 = scmp.eq.s32.totalorder %s21, 0
      %p111 = por %p109, %p110
      %s113 = sadd.s32 %s112, 1
      %p116 = scmp.eq.s32.totalorder %s15, 1
      %p117 = scmp.ne.s32.totalorder %s112, %s114
      %p118 = scmp.eq.s32.totalorder %s15, 0
      %p119 = por %p117, %p118
      %p120 = scmp.ne.s32.totalorder %s112, %s114
      %p121 = scmp.eq.s32.totalorder %s20, 1
      %p122 = por %p120, %p121
      %p123 = scmp.ne.s32.totalorder %s114, %s115
      %p124 = scmp.eq.s32.totalorder %s20, 0
      %p125 = por %p123, %p124
      %p126 = scmp.ne.s32.totalorder %s114, %s115
      %p127 = scmp.eq.s32.totalorder %s21, 1
      %p128 = por %p126, %p127
      %p130 = scmp.ne.s32.totalorder %s115, %s129
      %p131 = scmp.eq.s32.totalorder %s21, 0
      %p132 = por %p130, %p131
      %s134 = sadd.s32 %s133, 1
      %p137 = scmp.eq.s32.totalorder %s15, 1
      %p138 = scmp.ne.s32.totalorder %s133, %s135
      %p139 = scmp.eq.s32.totalorder %s15, 0
      %p140 = por %p138, %p139
      %p141 = scmp.ne.s32.totalorder %s133, %s135
      %p142 = scmp.eq.s32.totalorder %s20, 1
      %p143 = por %p141, %p142
      %p144 = scmp.ne.s32.totalorder %s135, %s136
      %p145 = scmp.eq.s32.totalorder %s20, 0
      %p146 = por %p144, %p145
      %p147 = scmp.ne.s32.totalorder %s135, %s136
      %p148 = scmp.eq.s32.totalorder %s21, 1
      %p149 = por %p147, %p148
      %p151 = scmp.ne.s32.totalorder %s136, %s150
      %p152 = scmp.eq.s32.totalorder %s21, 0
      %p153 = por %p151, %p152
      %s154 = ssub.s32 %s15, %s22
      %p155 = scmp.eq.s32.totalorder %s154, 0
      %s157 = sadd.s32 %s156, 1
      %s158 = scalar_select %p155, %s156, %s157
      %p161 = pneg %p155
      %p162 = scmp.eq.s32.totalorder %s15, 1
      %p163 = por %p161, %p162
      %p164 = scmp.ne.s32.totalorder %s156, %s159
      %p165 = scmp.eq.s32.totalorder %s15, 0
      %p166 = por %p164, %p165
      %p167 = scmp.ne.s32.totalorder %s156, %s159
      %p168 = scmp.eq.s32.totalorder %s20, 1
      %p169 = por %p167, %p168
      %p170 = scmp.ne.s32.totalorder %s159, %s160
      %p171 = scmp.eq.s32.totalorder %s20, 0
      %p172 = por %p170, %p171
      %p173 = scmp.ne.s32.totalorder %s159, %s160
      %p174 = scmp.eq.s32.totalorder %s21, 1
      %p175 = por %p173, %p174
      %p177 = scmp.ne.s32.totalorder %s160, %s176
      %p178 = scmp.eq.s32.totalorder %s21, 0
      %p179 = por %p177, %p178
      %p180 = scmp.le.s32.totalorder 1, %s15
      %p181 = scmp.lt.s32.totalorder %s15, 3
      %p182 = pnand %p180, %p181
      %p183 = pneg %p182
      // Predicated region
      $region9: #{tpu_custom_call.1} parent=5 // pred_check
        _
      $region10: #{tpu_custom_call.1} parent=5 // pred_check_branch
        %185 = sbr.rel (%p182) target = $region12
      $region11: #{tpu_custom_call.1} parent=5 // pred_region
        %s186 = ssub.s32 %s15, 1
        // Predicated region
        $region13: #{tpu_custom_call.1} parent=11 // pred_check
          %p187 = pneg %p62
        $region14: #{tpu_custom_call.1} parent=11 // pred_check_branch
          %189 = sbr.rel (%p187) target = $region16
        $region15: #{tpu_custom_call.1} parent=11 // pred_region
          _
        $region16: #{tpu_custom_call.1} parent=11 // pred_fallthru
          _
        // Predicated region
        $region17: #{tpu_custom_call.1} parent=11 // pred_check
          %p190 = pneg %p83
        $region18: #{tpu_custom_call.1} parent=11 // pred_check_branch
          %192 = sbr.rel (%p190) target = $region20
        $region19: #{tpu_custom_call.1} parent=11 // pred_region
          _
        $region20: #{tpu_custom_call.1} parent=11 // pred_fallthru
          _
        // Predicated region
        $region21: #{tpu_custom_call.1} parent=11 // pred_check
          %p193 = pneg %p104
        $region22: #{tpu_custom_call.1} parent=11 // pred_check_branch
          %195 = sbr.rel (%p193) target = $region24
        $region23: #{tpu_custom_call.1} parent=11 // pred_region
          _
        $region24: #{tpu_custom_call.1} parent=11 // pred_fallthru
          _
        // Predicated region
        $region25: #{tpu_custom_call.1} parent=11 // pred_check
          %p196 = pneg %p125
        $region26: #{tpu_custom_call.1} parent=11 // pred_check_branch
          %198 = sbr.rel (%p196) target = $region28
        $region27: #{tpu_custom_call.1} parent=11 // pred_region
          _
        $region28: #{tpu_custom_call.1} parent=11 // pred_fallthru
          _
        // Predicated region
        $region29: #{tpu_custom_call.1} parent=11 // pred_check
          %p199 = pneg %p146
        $region30: #{tpu_custom_call.1} parent=11 // pred_check_branch
          %201 = sbr.rel (%p199) target = $region32
        $region31: #{tpu_custom_call.1} parent=11 // pred_region
          _
        $region32: #{tpu_custom_call.1} parent=11 // pred_fallthru
          _
      $region12: #{tpu_custom_call.1} parent=5 // pred_fallthru
        _
      %p202 = scmp.lt.s32.totalorder %s15, 2
      // Predicated region
      $region33: #{tpu_custom_call.1} parent=5 // pred_check
        %p203 = pneg %p202
      $region34: #{tpu_custom_call.1} parent=5 // pred_check_branch
        %205 = sbr.rel (%p203) target = $region36
      $region35: #{tpu_custom_call.1} parent=5 // pred_region
        // Predicated region
        $region37: #{tpu_custom_call.1} parent=35 // pred_check
          %p206 = pneg %p35
        $region38: #{tpu_custom_call.1} parent=35 // pred_check_branch
          %208 = sbr.rel (%p206) target = $region40
        $region39: #{tpu_custom_call.1} parent=35 // pred_region
          %p209 = scmp.lt.s32.totalorder %s15, 1
          %s210 = scalar_select %p209, %s15, 1
          %s211 = smul.addr %s210, 8
          %s212 = scalar_lea.vmem %s0, %s211
        $region40: #{tpu_custom_call.1} parent=35 // pred_fallthru
          _
      $region36: #{tpu_custom_call.1} parent=5 // pred_fallthru
        _
      %p213 = scmp.le.s32.totalorder 1, %s15
      %p214 = scmp.lt.s32.totalorder %s15, 3
      %p215 = pnand %p213, %p214
      %p216 = pneg %p215
      // Predicated region
      $region41: #{tpu_custom_call.1} parent=5 // pred_check
        _
      $region42: #{tpu_custom_call.1} parent=5 // pred_check_branch
        %218 = sbr.rel (%p215) target = $region44
      $region43: #{tpu_custom_call.1} parent=5 // pred_region
        %s219 = ssub.s32 %s15, 1
        %p220 = scmp.lt.s32.totalorder %s20, 1
        %s221 = scalar_select %p220, %s20, 1
        %s222 = smul.addr %s221, 8
        %s223 = scalar_lea.vmem %s0, %s222
        %p224 = pneg %p41
        %p225 = pneg %p38
        %p226 = pneg %p62
        %p227 = pneg %p59
        %p228 = pneg %p83
        %p229 = pneg %p80
        %p230 = pneg %p104
        %p231 = pneg %p101
        %p232 = pneg %p125
        %p233 = pneg %p122
        %p234 = pneg %p146
        %p235 = pneg %p143
        %p236 = pneg %p172
        %p237 = pneg %p169
        %s238 = sand.u32 %s159, 1
        %s239 = scalar_lea.sflag [#allocation6], %s238
        %s240 = sand.u32 %s159, 1
        %s241 = smul.addr %s240, 8
        %s242 = scalar_lea.vmem [#allocation5], %s241
        %p243 = scmp.lt.s32.totalorder %s20, 1
        %s244 = scalar_select %p243, %s20, 1
        %s245 = smul.addr %s244, 8
        %s246 = scalar_lea.vmem %s0, %s245
        %v247 = vld [vmem:[%s246] sm:$0xff]
        %v248 = vld [vmem:[%s1] sm:$0xff]
        %v249 = vld [vmem:[%s1 + $0x8] sm:$0xff]
        %vm250 = vcmask 130048
        %v252 = vsel %vm250, %v247, 0
        %254 = vmatprep.subr.mxu0 0.0
        %255 = vmatpush1.msra.mxu0 0.0
        %256 = vmatprep.subr.mxu0 0.0
        %257 = vmatpush1.msra.mxu0 0.0
        %258 = vmatprep.subr.mxu0 0.0
        %259 = vmatpush1.msra.mxu0 0.0
        %260 = vmatprep.subr.mxu0 0.0
        %261 = vmatpush1.msra.mxu0 0.0
        %262 = vmatprep.subr.mxu0 0.0
        %263 = vmatpush1.msra.mxu0 0.0
        %264 = vmatprep.subr.mxu0 0.0
        %265 = vmatpush1.msra.mxu0 0.0
        %266 = vmatprep.subr.mxu0 0.0
        %267 = vmatpush1.msra.mxu0 0.0
        %268 = vmatprep.subr.mxu0 0.0
        %269 = vmatpush1.msra.mxu0 0.0
        %270 = vmatprep.subr.mxu0 0.0
        %271 = vmatpush1.msra.mxu0 0.0
        %272 = vmatprep.subr.mxu0 0.0
        %273 = vmatpush1.msra.mxu0 0.0
        %274 = vmatprep.subr.mxu0 0.0
        %275 = vmatpush1.msra.mxu0 0.0
        %276 = vmatprep.subr.mxu0 0.0
        %277 = vmatpush1.msra.mxu0 0.0
        %278 = vmatprep.subr.mxu0 0.0
        %279 = vmatpush1.msra.mxu0 0.0
        %280 = vmatprep.subr.mxu0 0.0
        %281 = vmatpush1.msra.mxu0 0.0
        %282 = vmatprep.subr.mxu0 0.0
        %283 = vmatpush1.msra.mxu0 %v249
        %284 = vmatprep.subr.mxu0 0.0
        %285 = vmatpush1.msra.mxu0 %v248
        %286 = vmatprep.subr.mxu0 0.0
        %287 = vmatpush2.msra.mxu0 0.0
        %288 = vmatprep.subr.mxu0 0.0
        %289 = vmatpush2.msra.mxu0 0.0
        %290 = vmatprep.subr.mxu0 0.0
        %291 = vmatpush2.msra.mxu0 0.0
        %292 = vmatprep.subr.mxu0 0.0
        %293 = vmatpush2.msra.mxu0 0.0
        %294 = vmatprep.subr.mxu0 0.0
        %295 = vmatpush2.msra.mxu0 0.0
        %296 = vmatprep.subr.mxu0 0.0
        %297 = vmatpush2.msra.mxu0 0.0
        %298 = vmatprep.subr.mxu0 0.0
        %299 = vmatpush2.msra.mxu0 0.0
        %300 = vmatprep.subr.mxu0 0.0
        %301 = vmatpush2.msra.mxu0 0.0
        %302 = vmatprep.subr.mxu0 0.0
        %303 = vmatpush2.msra.mxu0 0.0
        %304 = vmatprep.subr.mxu0 0.0
        %305 = vmatpush2.msra.mxu0 0.0
        %306 = vmatprep.subr.mxu0 0.0
        %307 = vmatpush2.msra.mxu0 0.0
        %308 = vmatprep.subr.mxu0 0.0
        %309 = vmatpush2.msra.mxu0 0.0
        %310 = vmatprep.subr.mxu0 0.0
        %311 = vmatpush2.msra.mxu0 0.0
        %312 = vmatprep.subr.mxu0 0.0
        %313 = vmatpush2.msra.mxu0 0.0
        %314 = vmatprep.subr.mxu0 0.0
        %315 = vmatpush2.msra.mxu0 0.0
        %316 = vmatprep.subr.mxu0 0.0
        %317 = vmatpush2.msra.mxu0 0.0
        %318 = vmatprep.mubr.f32.mxu0 0.0
        %319 = vmatmul.mubr.f32.gmra.mxu0 %v252
        %v320 = vpop.f32.mrf.mxu0
        %v321 = vadd.f32 0.0, %v320
        %v322 = vpop.f32.mrf.mxu0
        %323 = vdwg.mxu0
        %v324 = vmul.f32 %v321, 0.25
        %vm325 = vcmask 392192
        %326 = vst.msk [vmem:[#allocation2] sm:$0xff] %vm325, %v324
        %v327 = vld [vmem:[%s2] sm:$0xff]
        %v328 = vld [vmem:[%s2 + $0x8] sm:$0xff]
        %329 = vmatprep.subr.mxu0 0.0
        %330 = vmatpush1.msra.mxu0 0.0
        %331 = vmatprep.subr.mxu0 0.0
        %332 = vmatpush1.msra.mxu0 0.0
        %333 = vmatprep.subr.mxu0 0.0
        %334 = vmatpush1.msra.mxu0 0.0
        %335 = vmatprep.subr.mxu0 0.0
        %336 = vmatpush1.msra.mxu0 0.0
        %337 = vmatprep.subr.mxu0 0.0
        %338 = vmatpush1.msra.mxu0 0.0
        %339 = vmatprep.subr.mxu0 0.0
        %340 = vmatpush1.msra.mxu0 0.0
        %341 = vmatprep.subr.mxu0 0.0
        %342 = vmatpush1.msra.mxu0 0.0
        %343 = vmatprep.subr.mxu0 0.0
        %344 = vmatpush1.msra.mxu0 0.0
        %345 = vmatprep.subr.mxu0 0.0
        %346 = vmatpush1.msra.mxu0 0.0
        %347 = vmatprep.subr.mxu0 0.0
        %348 = vmatpush1.msra.mxu0 0.0
        %349 = vmatprep.subr.mxu0 0.0
        %350 = vmatpush1.msra.mxu0 0.0
        %351 = vmatprep.subr.mxu0 0.0
        %352 = vmatpush1.msra.mxu0 0.0
        %353 = vmatprep.subr.mxu0 0.0
        %354 = vmatpush1.msra.mxu0 0.0
        %355 = vmatprep.subr.mxu0 0.0
        %356 = vmatpush1.msra.mxu0 0.0
        %357 = vmatprep.subr.mxu0 0.0
        %358 = vmatpush1.msra.mxu0 %v328
        %359 = vmatprep.subr.mxu0 0.0
        %360 = vmatpush1.msra.mxu0 %v327
        %361 = vmatprep.subr.mxu0 0.0
        %362 = vmatpush2.msra.mxu0 0.0
        %363 = vmatprep.subr.mxu0 0.0
        %364 = vmatpush2.msra.mxu0 0.0
        %365 = vmatprep.subr.mxu0 0.0
        %366 = vmatpush2.msra.mxu0 0.0
        %367 = vmatprep.subr.mxu0 0.0
        %368 = vmatpush2.msra.mxu0 0.0
        %369 = vmatprep.subr.mxu0 0.0
        %370 = vmatpush2.msra.mxu0 0.0
        %371 = vmatprep.subr.mxu0 0.0
        %372 = vmatpush2.msra.mxu0 0.0
        %373 = vmatprep.subr.mxu0 0.0
        %374 = vmatpush2.msra.mxu0 0.0
        %375 = vmatprep.subr.mxu0 0.0
        %376 = vmatpush2.msra.mxu0 0.0
        %377 = vmatprep.subr.mxu0 0.0
        %378 = vmatpush2.msra.mxu0 0.0
        %379 = vmatprep.subr.mxu0 0.0
        %380 = vmatpush2.msra.mxu0 0.0
        %381 = vmatprep.subr.mxu0 0.0
        %382 = vmatpush2.msra.mxu0 0.0
        %383 = vmatprep.subr.mxu0 0.0
        %384 = vmatpush2.msra.mxu0 0.0
        %385 = vmatprep.subr.mxu0 0.0
        %386 = vmatpush2.msra.mxu0 0.0
        %387 = vmatprep.subr.mxu0 0.0
        %388 = vmatpush2.msra.mxu0 0.0
        %389 = vmatprep.subr.mxu0 0.0
        %390 = vmatpush2.msra.mxu0 0.0
        %391 = vmatprep.subr.mxu0 0.0
        %392 = vmatpush2.msra.mxu0 0.0
        %393 = vmatprep.mubr.f32.mxu0 0.0
        %394 = vmatmul.mubr.f32.gmra.mxu0 %v252
        %v395 = vpop.f32.mrf.mxu0
        %v396 = vadd.f32 0.0, %v395
        %v397 = vpop.f32.mrf.mxu0
        %398 = vdwg.mxu0
        %399 = vst.msk [vmem:[#allocation3] sm:$0xff] %vm325, %v396
        %v400 = vld [vmem:[%s3] sm:$0xff]
        %v401 = vld [vmem:[%s3 + $0x8] sm:$0xff]
        %402 = vmatprep.subr.mxu0 0.0
        %403 = vmatpush1.msra.mxu0 0.0
        %404 = vmatprep.subr.mxu0 0.0
        %405 = vmatpush1.msra.mxu0 0.0
        %406 = vmatprep.subr.mxu0 0.0
        %407 = vmatpush1.msra.mxu0 0.0
        %408 = vmatprep.subr.mxu0 0.0
        %409 = vmatpush1.msra.mxu0 0.0
        %410 = vmatprep.subr.mxu0 0.0
        %411 = vmatpush1.msra.mxu0 0.0
        %412 = vmatprep.subr.mxu0 0.0
        %413 = vmatpush1.msra.mxu0 0.0
        %414 = vmatprep.subr.mxu0 0.0
        %415 = vmatpush1.msra.mxu0 0.0
        %416 = vmatprep.subr.mxu0 0.0
        %417 = vmatpush1.msra.mxu0 0.0
        %418 = vmatprep.subr.mxu0 0.0
        %419 = vmatpush1.msra.mxu0 0.0
        %420 = vmatprep.subr.mxu0 0.0
        %421 = vmatpush1.msra.mxu0 0.0
        %422 = vmatprep.subr.mxu0 0.0
        %423 = vmatpush1.msra.mxu0 0.0
        %424 = vmatprep.subr.mxu0 0.0
        %425 = vmatpush1.msra.mxu0 0.0
        %426 = vmatprep.subr.mxu0 0.0
        %427 = vmatpush1.msra.mxu0 0.0
        %428 = vmatprep.subr.mxu0 0.0
        %429 = vmatpush1.msra.mxu0 0.0
        %430 = vmatprep.subr.mxu0 0.0
        %431 = vmatpush1.msra.mxu0 %v401
        %432 = vmatprep.subr.mxu0 0.0
        %433 = vmatpush1.msra.mxu0 %v400
        %434 = vmatprep.subr.mxu0 0.0
        %435 = vmatpush2.msra.mxu0 0.0
        %436 = vmatprep.subr.mxu0 0.0
        %437 = vmatpush2.msra.mxu0 0.0
        %438 = vmatprep.subr.mxu0 0.0
        %439 = vmatpush2.msra.mxu0 0.0
        %440 = vmatprep.subr.mxu0 0.0
        %441 = vmatpush2.msra.mxu0 0.0
        %442 = vmatprep.subr.mxu0 0.0
        %443 = vmatpush2.msra.mxu0 0.0
        %444 = vmatprep.subr.mxu0 0.0
        %445 = vmatpush2.msra.mxu0 0.0
        %446 = vmatprep.subr.mxu0 0.0
        %447 = vmatpush2.msra.mxu0 0.0
        %448 = vmatprep.subr.mxu0 0.0
        %449 = vmatpush2.msra.mxu0 0.0
        %450 = vmatprep.subr.mxu0 0.0
        %451 = vmatpush2.msra.mxu0 0.0
        %452 = vmatprep.subr.mxu0 0.0
        %453 = vmatpush2.msra.mxu0 0.0
        %454 = vmatprep.subr.mxu0 0.0
        %455 = vmatpush2.msra.mxu0 0.0
        %456 = vmatprep.subr.mxu0 0.0
        %457 = vmatpush2.msra.mxu0 0.0
        %458 = vmatprep.subr.mxu0 0.0
        %459 = vmatpush2.msra.mxu0 0.0
        %460 = vmatprep.subr.mxu0 0.0
        %461 = vmatpush2.msra.mxu0 0.0
        %462 = vmatprep.subr.mxu0 0.0
        %463 = vmatpush2.msra.mxu0 0.0
        %464 = vmatprep.subr.mxu0 0.0
        %465 = vmatpush2.msra.mxu0 0.0
        %466 = vmatprep.mubr.f32.mxu0 0.0
        %467 = vmatmul.mubr.f32.gmra.mxu0 %v252
        %v468 = vpop.f32.mrf.mxu0
        %v469 = vadd.f32 0.0, %v468
        %v470 = vpop.f32.mrf.mxu0
        %471 = vdwg.mxu0
        %472 = vst.msk [vmem:[#allocation4] sm:$0xff] %vm325, %v469
        %v473 = vld [vmem:[%s5] sm:$0x1]
        %v474 = vld [vmem:[#allocation2] sm:$0xff]
        %v475 = vld [vmem:[#allocation3] sm:$0xff]
        %v476 = vld [vmem:[#allocation4] sm:$0xff]
        %v478 = vsel %vm250, %v474, 0
        %v481 = vsel %vm250, %v475, 0
        %483 = vmatprep.subr.mxu0 0.0
        %484 = vmatpush1.xpose.msra.mxu0 0.0
        %485 = vmatprep.subr.mxu0 0.0
        %486 = vmatpush1.xpose.msra.mxu0 0.0
        %487 = vmatprep.subr.mxu0 0.0
        %488 = vmatpush1.xpose.msra.mxu0 0.0
        %489 = vmatprep.subr.mxu0 0.0
        %490 = vmatpush1.xpose.msra.mxu0 0.0
        %491 = vmatprep.subr.mxu0 0.0
        %492 = vmatpush1.xpose.msra.mxu0 0.0
        %493 = vmatprep.subr.mxu0 0.0
        %494 = vmatpush1.xpose.msra.mxu0 0.0
        %495 = vmatprep.subr.mxu0 0.0
        %496 = vmatpush1.xpose.msra.mxu0 0.0
        %497 = vmatprep.subr.mxu0 0.0
        %498 = vmatpush1.xpose.msra.mxu0 0.0
        %499 = vmatprep.subr.mxu0 0.0
        %500 = vmatpush1.xpose.msra.mxu0 0.0
        %501 = vmatprep.subr.mxu0 0.0
        %502 = vmatpush1.xpose.msra.mxu0 0.0
        %503 = vmatprep.subr.mxu0 0.0
        %504 = vmatpush1.xpose.msra.mxu0 0.0
        %505 = vmatprep.subr.mxu0 0.0
        %506 = vmatpush1.xpose.msra.mxu0 0.0
        %507 = vmatprep.subr.mxu0 0.0
        %508 = vmatpush1.xpose.msra.mxu0 0.0
        %509 = vmatprep.subr.mxu0 0.0
        %510 = vmatpush1.xpose.msra.mxu0 0.0
        %511 = vmatprep.subr.mxu0 0.0
        %512 = vmatpush1.xpose.msra.mxu0 0.0
        %513 = vmatprep.subr.mxu0 0.0
        %514 = vmatpush1.xpose.msra.mxu0 %v481
        %515 = vmatprep.subr.mxu0 0.0
        %516 = vmatpush2.xpose.msra.mxu0 0.0
        %517 = vmatprep.subr.mxu0 0.0
        %518 = vmatpush2.xpose.msra.mxu0 0.0
        %519 = vmatprep.subr.mxu0 0.0
        %520 = vmatpush2.xpose.msra.mxu0 0.0
        %521 = vmatprep.subr.mxu0 0.0
        %522 = vmatpush2.xpose.msra.mxu0 0.0
        %523 = vmatprep.subr.mxu0 0.0
        %524 = vmatpush2.xpose.msra.mxu0 0.0
        %525 = vmatprep.subr.mxu0 0.0
        %526 = vmatpush2.xpose.msra.mxu0 0.0
        %527 = vmatprep.subr.mxu0 0.0
        %528 = vmatpush2.xpose.msra.mxu0 0.0
        %529 = vmatprep.subr.mxu0 0.0
        %530 = vmatpush2.xpose.msra.mxu0 0.0
        %531 = vmatprep.subr.mxu0 0.0
        %532 = vmatpush2.xpose.msra.mxu0 0.0
        %533 = vmatprep.subr.mxu0 0.0
        %534 = vmatpush2.xpose.msra.mxu0 0.0
        %535 = vmatprep.subr.mxu0 0.0
        %536 = vmatpush2.xpose.msra.mxu0 0.0
        %537 = vmatprep.subr.mxu0 0.0
        %538 = vmatpush2.xpose.msra.mxu0 0.0
        %539 = vmatprep.subr.mxu0 0.0
        %540 = vmatpush2.xpose.msra.mxu0 0.0
        %541 = vmatprep.subr.mxu0 0.0
        %542 = vmatpush2.xpose.msra.mxu0 0.0
        %543 = vmatprep.subr.mxu0 0.0
        %544 = vmatpush2.xpose.msra.mxu0 0.0
        %545 = vmatprep.subr.mxu0 0.0
        %546 = vmatpush2.xpose.msra.mxu0 0.0
        %547 = vmatprep.mubr.f32.mxu0 0.0
        %548 = vmatmul.mubr.f32.gmra.mxu0 %v478
        %v549 = vpop.f32.mrf.mxu0
        %v550 = vadd.f32 0.0, %v549
        %v551 = vpop.f32.mrf.mxu0
        %552 = vdwg.mxu0
        %vm553 = vcmask 64512
        %v554 = vsel %vm553, %v550, -inf
        %555 = vmax.xlane.f32.xlu0 %v554
        %v556 = vpop.xlane.xlu0 %555
        %v557 = vsub.f32 %v550, %v556
        %v558 = vmul.f32 %v557, 1.442695
        %v559 = vpow.pop %v558
        %v560 = vsel %vm553, %v559, 0.0
        %561 = vadd.xlane.f32.xlu0 %v560
        %v562 = vpop.xlane.xlu0 %561
        %v563 = vrcp.pop %v562
        %v564 = vmul.f32 %v559, %v563
        %v566 = vsel %vm553, %v564, 0
        %568 = vmatprep.subr.mxu0 0.0
        %569 = vmatpush1.msra.mxu0 0.0
        %570 = vmatprep.subr.mxu0 0.0
        %571 = vmatpush1.msra.mxu0 0.0
        %572 = vmatprep.subr.mxu0 0.0
        %573 = vmatpush1.msra.mxu0 0.0
        %574 = vmatprep.subr.mxu0 0.0
        %575 = vmatpush1.msra.mxu0 0.0
        %576 = vmatprep.subr.mxu0 0.0
        %577 = vmatpush1.msra.mxu0 0.0
        %578 = vmatprep.subr.mxu0 0.0
        %579 = vmatpush1.msra.mxu0 0.0
        %580 = vmatprep.subr.mxu0 0.0
        %581 = vmatpush1.msra.mxu0 0.0
        %582 = vmatprep.subr.mxu0 0.0
        %583 = vmatpush1.msra.mxu0 0.0
        %584 = vmatprep.subr.mxu0 0.0
        %585 = vmatpush1.msra.mxu0 0.0
        %586 = vmatprep.subr.mxu0 0.0
        %587 = vmatpush1.msra.mxu0 0.0
        %588 = vmatprep.subr.mxu0 0.0
        %589 = vmatpush1.msra.mxu0 0.0
        %590 = vmatprep.subr.mxu0 0.0
        %591 = vmatpush1.msra.mxu0 0.0
        %592 = vmatprep.subr.mxu0 0.0
        %593 = vmatpush1.msra.mxu0 0.0
        %594 = vmatprep.subr.mxu0 0.0
        %595 = vmatpush1.msra.mxu0 0.0
        %596 = vmatprep.subr.mxu0 0.0
        %597 = vmatpush1.msra.mxu0 0.0
        %598 = vmatprep.subr.mxu0 0.0
        %599 = vmatpush1.msra.mxu0 %v476
        %600 = vmatprep.subr.mxu0 0.0
        %601 = vmatpush2.msra.mxu0 0.0
        %602 = vmatprep.subr.mxu0 0.0
        %603 = vmatpush2.msra.mxu0 0.0
        %604 = vmatprep.subr.mxu0 0.0
        %605 = vmatpush2.msra.mxu0 0.0
        %606 = vmatprep.subr.mxu0 0.0
        %607 = vmatpush2.msra.mxu0 0.0
        %608 = vmatprep.subr.mxu0 0.0
        %609 = vmatpush2.msra.mxu0 0.0
        %610 = vmatprep.subr.mxu0 0.0
        %611 = vmatpush2.msra.mxu0 0.0
        %612 = vmatprep.subr.mxu0 0.0
        %613 = vmatpush2.msra.mxu0 0.0
        %614 = vmatprep.subr.mxu0 0.0
        %615 = vmatpush2.msra.mxu0 0.0
        %616 = vmatprep.subr.mxu0 0.0
        %617 = vmatpush2.msra.mxu0 0.0
        %618 = vmatprep.subr.mxu0 0.0
        %619 = vmatpush2.msra.mxu0 0.0
        %620 = vmatprep.subr.mxu0 0.0
        %621 = vmatpush2.msra.mxu0 0.0
        %622 = vmatprep.subr.mxu0 0.0
        %623 = vmatpush2.msra.mxu0 0.0
        %624 = vmatprep.subr.mxu0 0.0
        %625 = vmatpush2.msra.mxu0 0.0
        %626 = vmatprep.subr.mxu0 0.0
        %627 = vmatpush2.msra.mxu0 0.0
        %628 = vmatprep.subr.mxu0 0.0
        %629 = vmatpush2.msra.mxu0 0.0
        %630 = vmatprep.subr.mxu0 0.0
        %631 = vmatpush2.msra.mxu0 0.0
        %632 = vmatprep.mubr.f32.mxu0 0.0
        %633 = vmatmul.mubr.f32.gmra.mxu0 %v566
        %v634 = vpop.f32.mrf.mxu0
        %v635 = vadd.f32 0.0, %v634
        %v636 = vpop.f32.mrf.mxu0
        %637 = vdwg.mxu0
        %v638 = vld [vmem:[%s4] sm:$0xff]
        %v639 = vld [vmem:[%s4 + $0x8] sm:$0xff]
        %640 = vrot.lane.b32.xlu0 %v474, 112
        %v641 = vpop.permute.xlu0 %640
        %642 = vrot.lane.b32.xlu0 %v475, 112
        %v643 = vpop.permute.xlu0 %642
        %v644 = vsel %vm250, %v641, 0
        %v646 = vsel %vm250, %v643, 0
        %648 = vmatprep.subr.mxu0 0.0
        %649 = vmatpush1.xpose.msra.mxu0 0.0
        %650 = vmatprep.subr.mxu0 0.0
        %651 = vmatpush1.xpose.msra.mxu0 0.0
        %652 = vmatprep.subr.mxu0 0.0
        %653 = vmatpush1.xpose.msra.mxu0 0.0
        %654 = vmatprep.subr.mxu0 0.0
        %655 = vmatpush1.xpose.msra.mxu0 0.0
        %656 = vmatprep.subr.mxu0 0.0
        %657 = vmatpush1.xpose.msra.mxu0 0.0
        %658 = vmatprep.subr.mxu0 0.0
        %659 = vmatpush1.xpose.msra.mxu0 0.0
        %660 = vmatprep.subr.mxu0 0.0
        %661 = vmatpush1.xpose.msra.mxu0 0.0
        %662 = vmatprep.subr.mxu0 0.0
        %663 = vmatpush1.xpose.msra.mxu0 0.0
        %664 = vmatprep.subr.mxu0 0.0
        %665 = vmatpush1.xpose.msra.mxu0 0.0
        %666 = vmatprep.subr.mxu0 0.0
        %667 = vmatpush1.xpose.msra.mxu0 0.0
        %668 = vmatprep.subr.mxu0 0.0
        %669 = vmatpush1.xpose.msra.mxu0 0.0
        %670 = vmatprep.subr.mxu0 0.0
        %671 = vmatpush1.xpose.msra.mxu0 0.0
        %672 = vmatprep.subr.mxu0 0.0
        %673 = vmatpush1.xpose.msra.mxu0 0.0
        %674 = vmatprep.subr.mxu0 0.0
        %675 = vmatpush1.xpose.msra.mxu0 0.0
        %676 = vmatprep.subr.mxu0 0.0
        %677 = vmatpush1.xpose.msra.mxu0 0.0
        %678 = vmatprep.subr.mxu0 0.0
        %679 = vmatpush1.xpose.msra.mxu0 %v646
        %680 = vmatprep.subr.mxu0 0.0
        %681 = vmatpush2.xpose.msra.mxu0 0.0
        %682 = vmatprep.subr.mxu0 0.0
        %683 = vmatpush2.xpose.msra.mxu0 0.0
        %684 = vmatprep.subr.mxu0 0.0
        %685 = vmatpush2.xpose.msra.mxu0 0.0
        %686 = vmatprep.subr.mxu0 0.0
        %687 = vmatpush2.xpose.msra.mxu0 0.0
        %688 = vmatprep.subr.mxu0 0.0
        %689 = vmatpush2.xpose.msra.mxu0 0.0
        %690 = vmatprep.subr.mxu0 0.0
        %691 = vmatpush2.xpose.msra.mxu0 0.0
        %692 = vmatprep.subr.mxu0 0.0
        %693 = vmatpush2.xpose.msra.mxu0 0.0
        %694 = vmatprep.subr.mxu0 0.0
        %695 = vmatpush2.xpose.msra.mxu0 0.0
        %696 = vmatprep.subr.mxu0 0.0
        %697 = vmatpush2.xpose.msra.mxu0 0.0
        %698 = vmatprep.subr.mxu0 0.0
        %699 = vmatpush2.xpose.msra.mxu0 0.0
        %700 = vmatprep.subr.mxu0 0.0
        %701 = vmatpush2.xpose.msra.mxu0 0.0
        %702 = vmatprep.subr.mxu0 0.0
        %703 = vmatpush2.xpose.msra.mxu0 0.0
        %704 = vmatprep.subr.mxu0 0.0
        %705 = vmatpush2.xpose.msra.mxu0 0.0
        %706 = vmatprep.subr.mxu0 0.0
        %707 = vmatpush2.xpose.msra.mxu0 0.0
        %708 = vmatprep.subr.mxu0 0.0
        %709 = vmatpush2.xpose.msra.mxu0 0.0
        %710 = vmatprep.subr.mxu0 0.0
        %711 = vmatpush2.xpose.msra.mxu0 0.0
        %712 = vmatprep.mubr.f32.mxu0 0.0
        %713 = vmatmul.mubr.f32.gmra.mxu0 %v644
        %v714 = vpop.f32.mrf.mxu0
        %v715 = vadd.f32 0.0, %v714
        %v716 = vpop.f32.mrf.mxu0
        %717 = vdwg.mxu0
        %v718 = vsel %vm553, %v715, -inf
        %719 = vmax.xlane.f32.xlu0 %v718
        %v720 = vpop.xlane.xlu0 %719
        %v721 = vsub.f32 %v715, %v720
        %v722 = vmul.f32 %v721, 1.442695
        %v723 = vpow.pop %v722
        %v724 = vsel %vm553, %v723, 0.0
        %725 = vadd.xlane.f32.xlu0 %v724
        %v726 = vpop.xlane.xlu0 %725
        %v727 = vrcp.pop %v726
        %v728 = vmul.f32 %v723, %v727
        %730 = vrot.lane.b32.xlu0 %v476, 112
        %v731 = vpop.permute.xlu0 %730
        %v734 = vsel %vm553, %v728, 0
        %736 = vmatprep.subr.mxu0 0.0
        %737 = vmatpush1.msra.mxu0 0.0
        %738 = vmatprep.subr.mxu0 0.0
        %739 = vmatpush1.msra.mxu0 0.0
        %740 = vmatprep.subr.mxu0 0.0
        %741 = vmatpush1.msra.mxu0 0.0
        %742 = vmatprep.subr.mxu0 0.0
        %743 = vmatpush1.msra.mxu0 0.0
        %744 = vmatprep.subr.mxu0 0.0
        %745 = vmatpush1.msra.mxu0 0.0
        %746 = vmatprep.subr.mxu0 0.0
        %747 = vmatpush1.msra.mxu0 0.0
        %748 = vmatprep.subr.mxu0 0.0
        %749 = vmatpush1.msra.mxu0 0.0
        %750 = vmatprep.subr.mxu0 0.0
        %751 = vmatpush1.msra.mxu0 0.0
        %752 = vmatprep.subr.mxu0 0.0
        %753 = vmatpush1.msra.mxu0 0.0
        %754 = vmatprep.subr.mxu0 0.0
        %755 = vmatpush1.msra.mxu0 0.0
        %756 = vmatprep.subr.mxu0 0.0
        %757 = vmatpush1.msra.mxu0 0.0
        %758 = vmatprep.subr.mxu0 0.0
        %759 = vmatpush1.msra.mxu0 0.0
        %760 = vmatprep.subr.mxu0 0.0
        %761 = vmatpush1.msra.mxu0 0.0
        %762 = vmatprep.subr.mxu0 0.0
        %763 = vmatpush1.msra.mxu0 0.0
        %764 = vmatprep.subr.mxu0 0.0
        %765 = vmatpush1.msra.mxu0 0.0
        %766 = vmatprep.subr.mxu0 0.0
        %767 = vmatpush1.msra.mxu0 %v731
        %768 = vmatprep.subr.mxu0 0.0
        %769 = vmatpush2.msra.mxu0 0.0
        %770 = vmatprep.subr.mxu0 0.0
        %771 = vmatpush2.msra.mxu0 0.0
        %772 = vmatprep.subr.mxu0 0.0
        %773 = vmatpush2.msra.mxu0 0.0
        %774 = vmatprep.subr.mxu0 0.0
        %775 = vmatpush2.msra.mxu0 0.0
        %776 = vmatprep.subr.mxu0 0.0
        %777 = vmatpush2.msra.mxu0 0.0
        %778 = vmatprep.subr.mxu0 0.0
        %779 = vmatpush2.msra.mxu0 0.0
        %780 = vmatprep.subr.mxu0 0.0
        %781 = vmatpush2.msra.mxu0 0.0
        %782 = vmatprep.subr.mxu0 0.0
        %783 = vmatpush2.msra.mxu0 0.0
        %784 = vmatprep.subr.mxu0 0.0
        %785 = vmatpush2.msra.mxu0 0.0
        %786 = vmatprep.subr.mxu0 0.0
        %787 = vmatpush2.msra.mxu0 0.0
        %788 = vmatprep.subr.mxu0 0.0
        %789 = vmatpush2.msra.mxu0 0.0
        %790 = vmatprep.subr.mxu0 0.0
        %791 = vmatpush2.msra.mxu0 0.0
        %792 = vmatprep.subr.mxu0 0.0
        %793 = vmatpush2.msra.mxu0 0.0
        %794 = vmatprep.subr.mxu0 0.0
        %795 = vmatpush2.msra.mxu0 0.0
        %796 = vmatprep.subr.mxu0 0.0
        %797 = vmatpush2.msra.mxu0 0.0
        %798 = vmatprep.subr.mxu0 0.0
        %799 = vmatpush2.msra.mxu0 0.0
        %800 = vmatprep.mubr.f32.mxu0 0.0
        %801 = vmatmul.mubr.f32.gmra.mxu0 %v734
        %v802 = vpop.f32.mrf.mxu0
        %v803 = vadd.f32 0.0, %v802
        %v804 = vpop.f32.mrf.mxu0
        %805 = vdwg.mxu0
        %v806 = vld [vmem:[%s4 + $0x10] sm:$0xff]
        %v807 = vld [vmem:[%s4 + $0x18] sm:$0xff]
        %v809 = vsel %vm250, %v803, 0
        %811 = vmatprep.subr.mxu0 0.0
        %812 = vmatpush1.msra.mxu0 0.0
        %813 = vmatprep.subr.mxu0 0.0
        %814 = vmatpush1.msra.mxu0 0.0
        %815 = vmatprep.subr.mxu0 0.0
        %816 = vmatpush1.msra.mxu0 0.0
        %817 = vmatprep.subr.mxu0 0.0
        %818 = vmatpush1.msra.mxu0 0.0
        %819 = vmatprep.subr.mxu0 0.0
        %820 = vmatpush1.msra.mxu0 0.0
        %821 = vmatprep.subr.mxu0 0.0
        %822 = vmatpush1.msra.mxu0 0.0
        %823 = vmatprep.subr.mxu0 0.0
        %824 = vmatpush1.msra.mxu0 0.0
        %825 = vmatprep.subr.mxu0 0.0
        %826 = vmatpush1.msra.mxu0 0.0
        %827 = vmatprep.subr.mxu0 0.0
        %828 = vmatpush1.msra.mxu0 0.0
        %829 = vmatprep.subr.mxu0 0.0
        %830 = vmatpush1.msra.mxu0 0.0
        %831 = vmatprep.subr.mxu0 0.0
        %832 = vmatpush1.msra.mxu0 0.0
        %833 = vmatprep.subr.mxu0 0.0
        %834 = vmatpush1.msra.mxu0 0.0
        %835 = vmatprep.subr.mxu0 0.0
        %836 = vmatpush1.msra.mxu0 0.0
        %837 = vmatprep.subr.mxu0 0.0
        %838 = vmatpush1.msra.mxu0 0.0
        %839 = vmatprep.subr.mxu0 0.0
        %840 = vmatpush1.msra.mxu0 %v807
        %841 = vmatprep.subr.mxu0 0.0
        %842 = vmatpush1.msra.mxu0 %v806
        %843 = vmatprep.subr.mxu0 0.0
        %844 = vmatpush2.msra.mxu0 0.0
        %845 = vmatprep.subr.mxu0 0.0
        %846 = vmatpush2.msra.mxu0 0.0
        %847 = vmatprep.subr.mxu0 0.0
        %848 = vmatpush2.msra.mxu0 0.0
        %849 = vmatprep.subr.mxu0 0.0
        %850 = vmatpush2.msra.mxu0 0.0
        %851 = vmatprep.subr.mxu0 0.0
        %852 = vmatpush2.msra.mxu0 0.0
        %853 = vmatprep.subr.mxu0 0.0
        %854 = vmatpush2.msra.mxu0 0.0
        %855 = vmatprep.subr.mxu0 0.0
        %856 = vmatpush2.msra.mxu0 0.0
        %857 = vmatprep.subr.mxu0 0.0
        %858 = vmatpush2.msra.mxu0 0.0
        %859 = vmatprep.subr.mxu0 0.0
        %860 = vmatpush2.msra.mxu0 0.0
        %861 = vmatprep.subr.mxu0 0.0
        %862 = vmatpush2.msra.mxu0 0.0
        %863 = vmatprep.subr.mxu0 0.0
        %864 = vmatpush2.msra.mxu0 0.0
        %865 = vmatprep.subr.mxu0 0.0
        %866 = vmatpush2.msra.mxu0 0.0
        %867 = vmatprep.subr.mxu0 0.0
        %868 = vmatpush2.msra.mxu0 0.0
        %869 = vmatprep.subr.mxu0 0.0
        %870 = vmatpush2.msra.mxu0 0.0
        %871 = vmatprep.subr.mxu0 0.0
        %872 = vmatpush2.msra.mxu0 0.0
        %873 = vmatprep.subr.mxu0 0.0
        %874 = vmatpush2.msra.mxu0 0.0
        %875 = vmatprep.mubr.f32.mxu0 0.0
        %876 = vmatmul.mubr.f32.gmra.mxu0 %v809
        %v877 = vpop.f32.mrf.mxu0
        %v878 = vadd.f32 0.0, %v877
        %v879 = vpop.f32.mrf.mxu0
        %880 = vdwg.mxu0
        %v882 = vsel %vm250, %v635, 0
        %884 = vmatprep.subr.mxu0 0.0
        %885 = vmatpush1.msra.mxu0 0.0
        %886 = vmatprep.subr.mxu0 0.0
        %887 = vmatpush1.msra.mxu0 0.0
        %888 = vmatprep.subr.mxu0 0.0
        %889 = vmatpush1.msra.mxu0 0.0
        %890 = vmatprep.subr.mxu0 0.0
        %891 = vmatpush1.msra.mxu0 0.0
        %892 = vmatprep.subr.mxu0 0.0
        %893 = vmatpush1.msra.mxu0 0.0
        %894 = vmatprep.subr.mxu0 0.0
        %895 = vmatpush1.msra.mxu0 0.0
        %896 = vmatprep.subr.mxu0 0.0
        %897 = vmatpush1.msra.mxu0 0.0
        %898 = vmatprep.subr.mxu0 0.0
        %899 = vmatpush1.msra.mxu0 0.0
        %900 = vmatprep.subr.mxu0 0.0
        %901 = vmatpush1.msra.mxu0 0.0
        %902 = vmatprep.subr.mxu0 0.0
        %903 = vmatpush1.msra.mxu0 0.0
        %904 = vmatprep.subr.mxu0 0.0
        %905 = vmatpush1.msra.mxu0 0.0
        %906 = vmatprep.subr.mxu0 0.0
        %907 = vmatpush1.msra.mxu0 0.0
        %908 = vmatprep.subr.mxu0 0.0
        %909 = vmatpush1.msra.mxu0 0.0
        %910 = vmatprep.subr.mxu0 0.0
        %911 = vmatpush1.msra.mxu0 0.0
        %912 = vmatprep.subr.mxu0 0.0
        %913 = vmatpush1.msra.mxu0 %v639
        %914 = vmatprep.subr.mxu0 0.0
        %915 = vmatpush1.msra.mxu0 %v638
        %916 = vmatprep.subr.mxu0 0.0
        %917 = vmatpush2.msra.mxu0 0.0
        %918 = vmatprep.subr.mxu0 0.0
        %919 = vmatpush2.msra.mxu0 0.0
        %920 = vmatprep.subr.mxu0 0.0
        %921 = vmatpush2.msra.mxu0 0.0
        %922 = vmatprep.subr.mxu0 0.0
        %923 = vmatpush2.msra.mxu0 0.0
        %924 = vmatprep.subr.mxu0 0.0
        %925 = vmatpush2.msra.mxu0 0.0
        %926 = vmatprep.subr.mxu0 0.0
        %927 = vmatpush2.msra.mxu0 0.0
        %928 = vmatprep.subr.mxu0 0.0
        %929 = vmatpush2.msra.mxu0 0.0
        %930 = vmatprep.subr.mxu0 0.0
        %931 = vmatpush2.msra.mxu0 0.0
        %932 = vmatprep.subr.mxu0 0.0
        %933 = vmatpush2.msra.mxu0 0.0
        %934 = vmatprep.subr.mxu0 0.0
        %935 = vmatpush2.msra.mxu0 0.0
        %936 = vmatprep.subr.mxu0 0.0
        %937 = vmatpush2.msra.mxu0 0.0
        %938 = vmatprep.subr.mxu0 0.0
        %939 = vmatpush2.msra.mxu0 0.0
        %940 = vmatprep.subr.mxu0 0.0
        %941 = vmatpush2.msra.mxu0 0.0
        %942 = vmatprep.subr.mxu0 0.0
        %943 = vmatpush2.msra.mxu0 0.0
        %944 = vmatprep.subr.mxu0 0.0
        %945 = vmatpush2.msra.mxu0 0.0
        %946 = vmatprep.subr.mxu0 0.0
        %947 = vmatpush2.msra.mxu0 0.0
        %948 = vmatprep.mubr.f32.mxu0 0.0
        %949 = vmatmul.mubr.f32.gmra.mxu0 %v882
        %v950 = vpop.f32.mrf.mxu0
        %v951 = vadd.f32 %v878, %v950
        %v952 = vpop.f32.mrf.mxu0
        %953 = vdwg.mxu0
        %954 = vrot.lane.b32.xlu0 %v474, 96
        %v955 = vpop.permute.xlu0 %954
        %956 = vrot.lane.b32.xlu0 %v475, 96
        %v957 = vpop.permute.xlu0 %956
        %v958 = vsel %vm250, %v955, 0
        %v960 = vsel %vm250, %v957, 0
        %962 = vmatprep.subr.mxu0 0.0
        %963 = vmatpush1.xpose.msra.mxu0 0.0
        %964 = vmatprep.subr.mxu0 0.0
        %965 = vmatpush1.xpose.msra.mxu0 0.0
        %966 = vmatprep.subr.mxu0 0.0
        %967 = vmatpush1.xpose.msra.mxu0 0.0
        %968 = vmatprep.subr.mxu0 0.0
        %969 = vmatpush1.xpose.msra.mxu0 0.0
        %970 = vmatprep.subr.mxu0 0.0
        %971 = vmatpush1.xpose.msra.mxu0 0.0
        %972 = vmatprep.subr.mxu0 0.0
        %973 = vmatpush1.xpose.msra.mxu0 0.0
        %974 = vmatprep.subr.mxu0 0.0
        %975 = vmatpush1.xpose.msra.mxu0 0.0
        %976 = vmatprep.subr.mxu0 0.0
        %977 = vmatpush1.xpose.msra.mxu0 0.0
        %978 = vmatprep.subr.mxu0 0.0
        %979 = vmatpush1.xpose.msra.mxu0 0.0
        %980 = vmatprep.subr.mxu0 0.0
        %981 = vmatpush1.xpose.msra.mxu0 0.0
        %982 = vmatprep.subr.mxu0 0.0
        %983 = vmatpush1.xpose.msra.mxu0 0.0
        %984 = vmatprep.subr.mxu0 0.0
        %985 = vmatpush1.xpose.msra.mxu0 0.0
        %986 = vmatprep.subr.mxu0 0.0
        %987 = vmatpush1.xpose.msra.mxu0 0.0
        %988 = vmatprep.subr.mxu0 0.0
        %989 = vmatpush1.xpose.msra.mxu0 0.0
        %990 = vmatprep.subr.mxu0 0.0
        %991 = vmatpush1.xpose.msra.mxu0 0.0
        %992 = vmatprep.subr.mxu0 0.0
        %993 = vmatpush1.xpose.msra.mxu0 %v960
        %994 = vmatprep.subr.mxu0 0.0
        %995 = vmatpush2.xpose.msra.mxu0 0.0
        %996 = vmatprep.subr.mxu0 0.0
        %997 = vmatpush2.xpose.msra.mxu0 0.0
        %998 = vmatprep.subr.mxu0 0.0
        %999 = vmatpush2.xpose.msra.mxu0 0.0
        %1000 = vmatprep.subr.mxu0 0.0
        %1001 = vmatpush2.xpose.msra.mxu0 0.0
        %1002 = vmatprep.subr.mxu0 0.0
        %1003 = vmatpush2.xpose.msra.mxu0 0.0
        %1004 = vmatprep.subr.mxu0 0.0
        %1005 = vmatpush2.xpose.msra.mxu0 0.0
        %1006 = vmatprep.subr.mxu0 0.0
        %1007 = vmatpush2.xpose.msra.mxu0 0.0
        %1008 = vmatprep.subr.mxu0 0.0
        %1009 = vmatpush2.xpose.msra.mxu0 0.0
        %1010 = vmatprep.subr.mxu0 0.0
        %1011 = vmatpush2.xpose.msra.mxu0 0.0
        %1012 = vmatprep.subr.mxu0 0.0
        %1013 = vmatpush2.xpose.msra.mxu0 0.0
        %1014 = vmatprep.subr.mxu0 0.0
        %1015 = vmatpush2.xpose.msra.mxu0 0.0
        %1016 = vmatprep.subr.mxu0 0.0
        %1017 = vmatpush2.xpose.msra.mxu0 0.0
        %1018 = vmatprep.subr.mxu0 0.0
        %1019 = vmatpush2.xpose.msra.mxu0 0.0
        %1020 = vmatprep.subr.mxu0 0.0
        %1021 = vmatpush2.xpose.msra.mxu0 0.0
        %1022 = vmatprep.subr.mxu0 0.0
        %1023 = vmatpush2.xpose.msra.mxu0 0.0
        %1024 = vmatprep.subr.mxu0 0.0
        %1025 = vmatpush2.xpose.msra.mxu0 0.0
        %1026 = vmatprep.mubr.f32.mxu0 0.0
        %1027 = vmatmul.mubr.f32.gmra.mxu0 %v958
        %v1028 = vpop.f32.mrf.mxu0
        %v1029 = vadd.f32 0.0, %v1028
        %v1030 = vpop.f32.mrf.mxu0
        %1031 = vdwg.mxu0
        %v1032 = vsel %vm553, %v1029, -inf
        %1033 = vmax.xlane.f32.xlu0 %v1032
        %v1034 = vpop.xlane.xlu0 %1033
        %v1035 = vsub.f32 %v1029, %v1034
        %v1036 = vmul.f32 %v1035, 1.442695
        %v1037 = vpow.pop %v1036
        %v1038 = vsel %vm553, %v1037, 0.0
        %1039 = vadd.xlane.f32.xlu0 %v1038
        %v1040 = vpop.xlane.xlu0 %1039
        %v1041 = vrcp.pop %v1040
        %v1042 = vmul.f32 %v1037, %v1041
        %1043 = vrot.lane.b32.xlu0 %v476, 96
        %v1044 = vpop.permute.xlu0 %1043
        %v1047 = vsel %vm553, %v1042, 0
        %1049 = vmatprep.subr.mxu0 0.0
        %1050 = vmatpush1.msra.mxu0 0.0
        %1051 = vmatprep.subr.mxu0 0.0
        %1052 = vmatpush1.msra.mxu0 0.0
        %1053 = vmatprep.subr.mxu0 0.0
        %1054 = vmatpush1.msra.mxu0 0.0
        %1055 = vmatprep.subr.mxu0 0.0
        %1056 = vmatpush1.msra.mxu0 0.0
        %1057 = vmatprep.subr.mxu0 0.0
        %1058 = vmatpush1.msra.mxu0 0.0
        %1059 = vmatprep.subr.mxu0 0.0
        %1060 = vmatpush1.msra.mxu0 0.0
        %1061 = vmatprep.subr.mxu0 0.0
        %1062 = vmatpush1.msra.mxu0 0.0
        %1063 = vmatprep.subr.mxu0 0.0
        %1064 = vmatpush1.msra.mxu0 0.0
        %1065 = vmatprep.subr.mxu0 0.0
        %1066 = vmatpush1.msra.mxu0 0.0
        %1067 = vmatprep.subr.mxu0 0.0
        %1068 = vmatpush1.msra.mxu0 0.0
        %1069 = vmatprep.subr.mxu0 0.0
        %1070 = vmatpush1.msra.mxu0 0.0
        %1071 = vmatprep.subr.mxu0 0.0
        %1072 = vmatpush1.msra.mxu0 0.0
        %1073 = vmatprep.subr.mxu0 0.0
        %1074 = vmatpush1.msra.mxu0 0.0
        %1075 = vmatprep.subr.mxu0 0.0
        %1076 = vmatpush1.msra.mxu0 0.0
        %1077 = vmatprep.subr.mxu0 0.0
        %1078 = vmatpush1.msra.mxu0 0.0
        %1079 = vmatprep.subr.mxu0 0.0
        %1080 = vmatpush1.msra.mxu0 %v1044
        %1081 = vmatprep.subr.mxu0 0.0
        %1082 = vmatpush2.msra.mxu0 0.0
        %1083 = vmatprep.subr.mxu0 0.0
        %1084 = vmatpush2.msra.mxu0 0.0
        %1085 = vmatprep.subr.mxu0 0.0
        %1086 = vmatpush2.msra.mxu0 0.0
        %1087 = vmatprep.subr.mxu0 0.0
        %1088 = vmatpush2.msra.mxu0 0.0
        %1089 = vmatprep.subr.mxu0 0.0
        %1090 = vmatpush2.msra.mxu0 0.0
        %1091 = vmatprep.subr.mxu0 0.0
        %1092 = vmatpush2.msra.mxu0 0.0
        %1093 = vmatprep.subr.mxu0 0.0
        %1094 = vmatpush2.msra.mxu0 0.0
        %1095 = vmatprep.subr.mxu0 0.0
        %1096 = vmatpush2.msra.mxu0 0.0
        %1097 = vmatprep.subr.mxu0 0.0
        %1098 = vmatpush2.msra.mxu0 0.0
        %1099 = vmatprep.subr.mxu0 0.0
        %1100 = vmatpush2.msra.mxu0 0.0
        %1101 = vmatprep.subr.mxu0 0.0
        %1102 = vmatpush2.msra.mxu0 0.0
        %1103 = vmatprep.subr.mxu0 0.0
        %1104 = vmatpush2.msra.mxu0 0.0
        %1105 = vmatprep.subr.mxu0 0.0
        %1106 = vmatpush2.msra.mxu0 0.0
        %1107 = vmatprep.subr.mxu0 0.0
        %1108 = vmatpush2.msra.mxu0 0.0
        %1109 = vmatprep.subr.mxu0 0.0
        %1110 = vmatpush2.msra.mxu0 0.0
        %1111 = vmatprep.subr.mxu0 0.0
        %1112 = vmatpush2.msra.mxu0 0.0
        %1113 = vmatprep.mubr.f32.mxu0 0.0
        %1114 = vmatmul.mubr.f32.gmra.mxu0 %v1047
        %v1115 = vpop.f32.mrf.mxu0
        %v1116 = vadd.f32 0.0, %v1115
        %v1117 = vpop.f32.mrf.mxu0
        %1118 = vdwg.mxu0
        %v1119 = vld [vmem:[%s4 + $0x20] sm:$0xff]
        %v1120 = vld [vmem:[%s4 + $0x28] sm:$0xff]
        %v1122 = vsel %vm250, %v1116, 0
        %1124 = vmatprep.subr.mxu0 0.0
        %1125 = vmatpush1.msra.mxu0 0.0
        %1126 = vmatprep.subr.mxu0 0.0
        %1127 = vmatpush1.msra.mxu0 0.0
        %1128 = vmatprep.subr.mxu0 0.0
        %1129 = vmatpush1.msra.mxu0 0.0
        %1130 = vmatprep.subr.mxu0 0.0
        %1131 = vmatpush1.msra.mxu0 0.0
        %1132 = vmatprep.subr.mxu0 0.0
        %1133 = vmatpush1.msra.mxu0 0.0
        %1134 = vmatprep.subr.mxu0 0.0
        %1135 = vmatpush1.msra.mxu0 0.0
        %1136 = vmatprep.subr.mxu0 0.0
        %1137 = vmatpush1.msra.mxu0 0.0
        %1138 = vmatprep.subr.mxu0 0.0
        %1139 = vmatpush1.msra.mxu0 0.0
        %1140 = vmatprep.subr.mxu0 0.0
        %1141 = vmatpush1.msra.mxu0 0.0
        %1142 = vmatprep.subr.mxu0 0.0
        %1143 = vmatpush1.msra.mxu0 0.0
        %1144 = vmatprep.subr.mxu0 0.0
        %1145 = vmatpush1.msra.mxu0 0.0
        %1146 = vmatprep.subr.mxu0 0.0
        %1147 = vmatpush1.msra.mxu0 0.0
        %1148 = vmatprep.subr.mxu0 0.0
        %1149 = vmatpush1.msra.mxu0 0.0
        %1150 = vmatprep.subr.mxu0 0.0
        %1151 = vmatpush1.msra.mxu0 0.0
        %1152 = vmatprep.subr.mxu0 0.0
        %1153 = vmatpush1.msra.mxu0 %v1120
        %1154 = vmatprep.subr.mxu0 0.0
        %1155 = vmatpush1.msra.mxu0 %v1119
        %1156 = vmatprep.subr.mxu0 0.0
        %1157 = vmatpush2.msra.mxu0 0.0
        %1158 = vmatprep.subr.mxu0 0.0
        %1159 = vmatpush2.msra.mxu0 0.0
        %1160 = vmatprep.subr.mxu0 0.0
        %1161 = vmatpush2.msra.mxu0 0.0
        %1162 = vmatprep.subr.mxu0 0.0
        %1163 = vmatpush2.msra.mxu0 0.0
        %1164 = vmatprep.subr.mxu0 0.0
        %1165 = vmatpush2.msra.mxu0 0.0
        %1166 = vmatprep.subr.mxu0 0.0
        %1167 = vmatpush2.msra.mxu0 0.0
        %1168 = vmatprep.subr.mxu0 0.0
        %1169 = vmatpush2.msra.mxu0 0.0
        %1170 = vmatprep.subr.mxu0 0.0
        %1171 = vmatpush2.msra.mxu0 0.0
        %1172 = vmatprep.subr.mxu0 0.0
        %1173 = vmatpush2.msra.mxu0 0.0
        %1174 = vmatprep.subr.mxu0 0.0
        %1175 = vmatpush2.msra.mxu0 0.0
        %1176 = vmatprep.subr.mxu0 0.0
        %1177 = vmatpush2.msra.mxu0 0.0
        %1178 = vmatprep.subr.mxu0 0.0
        %1179 = vmatpush2.msra.mxu0 0.0
        %1180 = vmatprep.subr.mxu0 0.0
        %1181 = vmatpush2.msra.mxu0 0.0
        %1182 = vmatprep.subr.mxu0 0.0
        %1183 = vmatpush2.msra.mxu0 0.0
        %1184 = vmatprep.subr.mxu0 0.0
        %1185 = vmatpush2.msra.mxu0 0.0
        %1186 = vmatprep.subr.mxu0 0.0
        %1187 = vmatpush2.msra.mxu0 0.0
        %1188 = vmatprep.mubr.f32.mxu0 0.0
        %1189 = vmatmul.mubr.f32.gmra.mxu0 %v1122
        %v1190 = vpop.f32.mrf.mxu0
        %v1191 = vadd.f32 0.0, %v1190
        %v1192 = vpop.f32.mrf.mxu0
        %1193 = vdwg.mxu0
        %v1194 = vadd.f32 %v951, %v1191
        %v1196 = vlaneseq
        %v1197 = vshrl.u32 %v1196, 7
        %v1198 = vsub.s32 0, %v1197
        %v1199 = vrot.slane %v473, %v1198
        %v1201 = vadd.f32 %v1194, %v1199
        %1202 = vst.msk [vmem:[%s242] sm:$0xff] %vm250, %v1201
        %s1203 = sand.u32 %s159, 1
        %s1204 = scalar_lea.sflag [#allocation6], %s1203
        %s1205 = sand.u32 %s159, 1
        %s1206 = smul.addr %s1205, 8
        %s1207 = scalar_lea.vmem [#allocation5], %s1206
        // Predicated region
        $region45: #{tpu_custom_call.1} parent=43 // pred_check
          %p1208 = pneg %p169
        $region46: #{tpu_custom_call.1} parent=43 // pred_check_branch
          %1210 = sbr.rel (%p1208) target = $region48
        $region47: #{tpu_custom_call.1} parent=43 // pred_region
          %s1212 = ssub.s32 128, 128
          %1213 = vsyncadd %s1204, %s1212
          %s1214 = smul.addr %s20, 128
          %s1215 = scalar_lea.hbm %s6, %s1214
          %s1217 = sshll.u32 %s1207, 4
          %s1218 = int_to_ptr.vmem [resolvable:$true] %s1217
          %1220 = dma.vmem_to_hbm [thread:$0]  %s1218, 128, %s1215, %s1204
        $region48: #{tpu_custom_call.1} parent=43 // pred_fallthru
          _
      $region44: #{tpu_custom_call.1} parent=5 // pred_fallthru
        _
      %p1221 = scmp.le.s32.totalorder 2, %s15
      // Predicated region
      $region49: #{tpu_custom_call.1} parent=5 // pred_check
        %p1222 = pneg %p1221
      $region50: #{tpu_custom_call.1} parent=5 // pred_check_branch
        %1224 = sbr.rel (%p1222) target = $region52
      $region51: #{tpu_custom_call.1} parent=5 // pred_region
        %s1225 = ssub.s32 %s15, 2
        // Predicated region
        $region53: #{tpu_custom_call.1} parent=51 // pred_check
          %p1226 = pneg %p175
        $region54: #{tpu_custom_call.1} parent=51 // pred_check_branch
          %1228 = sbr.rel (%p1226) target = $region56
        $region55: #{tpu_custom_call.1} parent=51 // pred_region
          %s1229 = sand.u32 %s160, 1
          %s1230 = scalar_lea.sflag [#allocation6], %s1229
          %s1231 = sand.u32 %s160, 1
          %s1232 = smul.addr %s1231, 8
          %s1233 = scalar_lea.vmem [#allocation5], %s1232
          %1234 = dma.done %s1230, 128
        $region56: #{tpu_custom_call.1} parent=51 // pred_fallthru
          _
      $region52: #{tpu_custom_call.1} parent=5 // pred_fallthru
        _
    $region6: #{tpu_custom_call.1} parent=1 // loop_footer
      %s19 = sadd.s32 1, %s15
    $region7: #{tpu_custom_call.1} parent=1 // loop_footer_branch
      %14 = sbr.rel target = $region3
    $region8: #{tpu_custom_call.1} parent=1 // loop_exit
      _
    %1235 = vsyncpa [#allocation6], 1
    %s1236 = scalar_lea.sflag [#allocation6], 1
    %1237 = vsyncpa %s1236, 1

</llo_original>
